<compile_context>
chip_gen: v6e
topology: v6e:2x2x1
jax: 0.10.0
libtpu: 0.0.40
codegen_flags: <defaults>
</compile_context>

<pallas_src>
import functools

import jax
import jax.numpy as jnp
from jax.experimental import pallas as pl
from jax.experimental.pallas import tpu as pltpu


# ----------------------------------------------------------------------------
# Wrapper-side constant builders (cheap, one-time XLA ops).
# ----------------------------------------------------------------------------
def _interp_matrix_ac(n_in: int, n_out: int) -> jax.Array:
    """Interpolation matrix M (n_out, n_in) s.t. out = M @ in, align_corners=True."""
    if n_in == 1:
        return jnp.ones((n_out, 1), jnp.float32)
    src = jnp.arange(n_out, dtype=jnp.float32) * (n_in - 1) / (n_out - 1)
    lo = jnp.clip(jnp.floor(src).astype(jnp.int32), 0, n_in - 2)
    frac = src - lo.astype(jnp.float32)
    rows = jnp.arange(n_out)
    m = jnp.zeros((n_out, n_in), jnp.float32)
    m = m.at[rows, lo].add(1.0 - frac)
    m = m.at[rows, lo + 1].add(frac)
    return m


def _upsample_kron(H: int, W: int) -> jax.Array:
    """K (H*W, 2H*2W) s.t. flat_out = flat_in @ K implements bilinear x2, align_corners=True."""
    ah = _interp_matrix_ac(H, 2 * H)          # (Ho, H)
    aw = _interp_matrix_ac(W, 2 * W)          # (Wo, W)
    return jnp.kron(ah, aw).T                 # (H*W, Ho*Wo)


def _fold_w(w: jax.Array) -> jax.Array:
    """(Cout, Cin, 3, 3) -> (Cout, 9*Cin): tap-major (ky,kx), Cin inner; bf16 for the MXU."""
    co, ci = w.shape[0], w.shape[1]
    return jnp.transpose(w, (0, 2, 3, 1)).reshape(co, 9 * ci).astype(jnp.bfloat16)


def _place_matrix(Ho: int, Wo: int, H2: int, W2: int) -> jax.Array:
    """0/1 placement matrix (Ho*Wo, H2*W2) implementing the centered F.pad."""
    dY, dX = H2 - Ho, W2 - Wo
    rows = jnp.arange(Ho * Wo)
    y, x = rows // Wo, rows % Wo
    cols = (y + dY // 2) * W2 + (x + dX // 2)
    return jnp.zeros((Ho * Wo, H2 * W2), jnp.float32).at[rows, cols].set(1.0)


# ----------------------------------------------------------------------------
# In-kernel helpers (pure jnp on lane-dense (C, H*W) slabs).
# ----------------------------------------------------------------------------
def _leaky(x, slope):
    return jnp.where(x >= 0, x, slope * x)


def _patches9(x, W):
    """x: (C, H*W) -> (9*C, H*W): tap-major zero-padded 3x3 shifted views.

    Built with static lane-window slices of a flat zero-padded slab; vertical OOB reads
    land in the zero pad, only the horizontal row-wrap needs a column mask.
    """
    C, HW = x.shape
    pad = W + 1
    zpad = jnp.zeros((C, pad), x.dtype)
    xp = jnp.concatenate([zpad, x, zpad], axis=1)                 # (C, HW + 2W + 2)
    col = jax.lax.broadcasted_iota(jnp.int32, (1, HW), 1) % W
    slabs = []
    for oy in (-1, 0, 1):
        for ox in (-1, 0, 1):
            s = oy * W + ox
            sh = jax.lax.slice_in_dim(xp, pad + s, pad + s + HW, axis=1)
            if ox != 0:
                valid = (col + ox >= 0) & (col + ox < W)
                sh = jnp.where(valid, sh, 0.0)
            slabs.append(sh)
    return jnp.concatenate(slabs, axis=0)                          # (9*C, HW)


def _conv3x3(x, w_folded, b, W, slope):
    """x: (Cin, HW) f32; w_folded: (Cout, 9*Cin) bf16; b: (Cout, 1) f32 -> (Cout, HW) f32."""
    p = _patches9(x, W).astype(jnp.bfloat16)
    acc = jnp.dot(w_folded, p, preferred_element_type=jnp.float32)
    return _leaky(acc + b, slope)


# ----------------------------------------------------------------------------
# Fused Up kernel: one grid step per batch item.
# ----------------------------------------------------------------------------
def _up_fused_kernel(*refs, W_up, W2, negative_slope, has_skip, has_place):
    it = iter(refs)
    x1_ref, kup_ref = next(it), next(it)
    w1_ref, b1_ref = next(it), next(it)
    w2_ref, b2_ref = next(it), next(it)
    if has_skip:
        x2_ref, wff_ref = next(it), next(it)
    wfu_ref, bf_ref = next(it), next(it)
    place_ref = next(it) if has_place else None
    o_ref = next(it)

    # 1) bilinear x2 upsample (align_corners=True): one lane-dense kron matmul (f32).
    up = jnp.dot(x1_ref[0], kup_ref[...], preferred_element_type=jnp.float32)  # (Cin, Ho*Wo)

    # 2) double conv: each 3x3 conv is ONE folded (Cout, 9*Cin) @ (9*Cin, HW) MXU matmul.
    h = _conv3x3(up, w1_ref[...], b1_ref[...], W_up, negative_slope)
    h = _conv3x3(h, w2_ref[...], b2_ref[...], W_up, negative_slope)

    # 3) centered F.pad onto the skip grid (only when x2 is spatially larger) as a 0/1
    #    placement matmul; the identity case is skipped statically.
    if has_place:
        h = jnp.dot(h, place_ref[...], preferred_element_type=jnp.float32)     # (C2, H2*W2)

    # 4) final conv over the (virtual) channel concat [x2, h]: two partial accumulations,
    #    so the concatenated tensor is never materialized.
    acc = jnp.dot(wfu_ref[...], _patches9(h, W2).astype(jnp.bfloat16),
                  preferred_element_type=jnp.float32)
    if has_skip:
        acc = acc + jnp.dot(wff_ref[...], _patches9(x2_ref[0], W2).astype(jnp.bfloat16),
                            preferred_element_type=jnp.float32)
    acc = _leaky(acc + bf_ref[...], negative_slope)
    o_ref[0] = acc.astype(o_ref.dtype)                                          # lane-dense store


def up_forward(params, x1, x2=None, negative_slope: float = 0.01):
    N, Cin, H1, W1 = x1.shape
    Ho, Wo = 2 * H1, 2 * W1
    HW1, HWu = H1 * W1, Ho * Wo
    C1 = params["w1"].shape[0]
    C2 = params["w2"].shape[0]
    Cf = params["wf"].shape[0]

    kup = _upsample_kron(H1, W1)                                   # (HW1, HWu) f32
    w1m, b1 = _fold_w(params["w1"]), params["b1"].reshape(C1, 1)
    w2m, b2 = _fold_w(params["w2"]), params["b2"].reshape(C2, 1)
    bfv = params["bf"].reshape(Cf, 1)

    has_skip = x2 is not None
    if has_skip:
        Cfeat, H2, W2 = x2.shape[1], x2.shape[2], x2.shape[3]
        wff = _fold_w(params["wf"][:, :Cfeat])
        wfu = _fold_w(params["wf"][:, Cfeat:])
        # TODO(synk): only non-negative spatial diffs (x2 >= upsampled x1) are supported.
        has_place = (H2, W2) != (Ho, Wo)
    else:
        H2, W2 = Ho, Wo
        wfu = _fold_w(params["wf"])
        has_place = False
    HW2 = H2 * W2

    inputs = [x1.reshape(N, Cin, HW1), kup, w1m, b1, w2m, b2]
    in_specs = [
        pl.BlockSpec((1, Cin, HW1), lambda n: (n, 0, 0)),
        pl.BlockSpec((HW1, HWu), lambda n: (0, 0)),
        pl.BlockSpec((C1, 9 * Cin), lambda n: (0, 0)),
        pl.BlockSpec((C1, 1), lambda n: (0, 0)),
        pl.BlockSpec((C2, 9 * C1), lambda n: (0, 0)),
        pl.BlockSpec((C2, 1), lambda n: (0, 0)),
    ]
    if has_skip:
        inputs += [x2.reshape(N, Cfeat, HW2), wff]
        in_specs += [pl.BlockSpec((1, Cfeat, HW2), lambda n: (n, 0, 0)),
                     pl.BlockSpec(wff.shape, lambda n: (0, 0))]
    inputs += [wfu, bfv]
    in_specs += [pl.BlockSpec(wfu.shape, lambda n: (0, 0)),
                 pl.BlockSpec((Cf, 1), lambda n: (0, 0))]
    if has_place:
        inputs.append(_place_matrix(Ho, Wo, H2, W2))
        in_specs.append(pl.BlockSpec((HWu, HW2), lambda n: (0, 0)))

    kernel = functools.partial(
        _up_fused_kernel, W_up=Wo, W2=W2, negative_slope=negative_slope,
        has_skip=has_skip, has_place=has_place)

    out = pl.pallas_call(
        kernel,
        out_shape=jax.ShapeDtypeStruct((N, Cf, HW2), x1.dtype),
        grid_spec=pltpu.PrefetchScalarGridSpec(
            num_scalar_prefetch=0,
            grid=(N,),
            in_specs=in_specs,
            out_specs=pl.BlockSpec((1, Cf, HW2), lambda n: (n, 0, 0)),
        ),
        compiler_params=pltpu.CompilerParams(
            dimension_semantics=("parallel",),   # N>=2 keeps both v7x TensorCores busy
        ),
    )(*inputs)
    return out.reshape(N, Cf, H2, W2)


# ----------------------------------------------------------------------------
# Pure-JAX reference (independent of the kernel implementation path).
# ----------------------------------------------------------------------------
def _center_pad_to(x, Ht, Wt):
    N, C, H, W = x.shape
    dY, dX = Ht - H, Wt - W
    return jnp.pad(x, ((0, 0), (0, 0), (dY // 2, dY - dY // 2), (dX // 2, dX - dX // 2)))


def _upsample_bilinear2x_ac_ref(x):
    N, C, H, W = x.shape
    Ho, Wo = 2 * H, 2 * W
    ys = jnp.arange(Ho, dtype=jnp.float32) * (H - 1) / (Ho - 1)
    xs = jnp.arange(Wo, dtype=jnp.float32) * (W - 1) / (Wo - 1)
    y0 = jnp.clip(jnp.floor(ys).astype(jnp.int32), 0, H - 2)
    x0 = jnp.clip(jnp.floor(xs).astype(jnp.int32), 0, W - 2)
    fy = (ys - y0).reshape(1, 1, Ho, 1)
    fx = (xs - x0).reshape(1, 1, 1, Wo)
    top, bot = x[:, :, y0, :], x[:, :, y0 + 1, :]
    v = top * (1.0 - fy) + bot * fy
    left, right = v[:, :, :, x0], v[:, :, :, x0 + 1]
    return left * (1.0 - fx) + right * fx


def _conv3x3_leaky_ref(x, w, b, negative_slope=0.01):
    y = jax.lax.conv_general_dilated(
        x, w, window_strides=(1, 1), padding=((1, 1), (1, 1)),
        dimension_numbers=("NCHW", "OIHW", "NCHW"),
        precision=jax.lax.Precision.HIGHEST,
    )
    y = y + b[None, :, None, None]
    return jnp.where(y >= 0, y, negative_slope * y)


def up_forward_ref(params, x1, x2=None, negative_slope: float = 0.01):
    x1 = _upsample_bilinear2x_ac_ref(x1)
    x1 = _conv3x3_leaky_ref(x1, params["w1"], params["b1"], negative_slope)
    x1 = _conv3x3_leaky_ref(x1, params["w2"], params["b2"], negative_slope)
    if x2 is not None:
        x1 = _center_pad_to(x1, x2.shape[2], x2.shape[3])
        x = jnp.concatenate([x2, x1], axis=1)
    else:
        x = x1
    return _conv3x3_leaky_ref(x, params["wf"], params["bf"], negative_slope)


if __name__ == "__main__":
    key = jax.random.PRNGKey(0)
    N = 2
    in_channels, feat_channels, out_channels = 4, 4, 8
    H1 = W1 = 8        # x1 spatial (before x2 upsample)
    H2 = W2 = 16       # x2 spatial (matches upsampled x1)

    keys = jax.random.split(key, 6)
    x1 = jax.random.normal(keys[0], (N, in_channels, H1, W1), jnp.float32)
    x2 = jax.random.normal(keys[1], (N, feat_channels, H2, W2), jnp.float32)

    def init_conv(k, cout, cin):
        kw, kb = jax.random.split(k)
        bound = 1.0 / ((cin * 9) ** 0.5)
        w = jax.random.uniform(kw, (cout, cin, 3, 3), jnp.float32, -bound, bound)
        b = jax.random.uniform(kb, (cout,), jnp.float32, -bound, bound)
        return w, b

    w1, b1 = init_conv(keys[2], out_channels, in_channels)
    w2, b2 = init_conv(keys[3], out_channels, out_channels)
    wf, bf = init_conv(keys[4], out_channels, feat_channels + out_channels)
    params = dict(w1=w1, b1=b1, w2=w2, b2=b2, wf=wf, bf=bf)

    out = up_forward(params, x1, x2)
    out = jax.block_until_ready(out)

    ref = up_forward_ref(params, x1, x2)
    assert out.shape == (N, out_channels, H2, W2)
    # Tolerance accounts for bf16 MXU operands (f32 accumulation) vs the HIGHEST-precision
    # f32 reference across three chained convs.
    assert jnp.allclose(out, ref, atol=3e-2, rtol=3e-2), float(jnp.max(jnp.abs(out - ref)))

    print("KERNEL_OK")
</pallas_src>

<mosaic_0001>
module attributes {stable_mosaic.version = 11 : i64} {
  func.func @_up_fused_kernel(%arg0: i32, %arg1: memref<1x4x64xf32, #tpu.memory_space<vmem>>, %arg2: memref<64x256xf32, #tpu.memory_space<vmem>>, %arg3: memref<8x36xbf16, #tpu.memory_space<vmem>>, %arg4: memref<8x1xf32, #tpu.memory_space<vmem>>, %arg5: memref<8x72xbf16, #tpu.memory_space<vmem>>, %arg6: memref<8x1xf32, #tpu.memory_space<vmem>>, %arg7: memref<1x4x256xf32, #tpu.memory_space<vmem>>, %arg8: memref<8x36xbf16, #tpu.memory_space<vmem>>, %arg9: memref<8x72xbf16, #tpu.memory_space<vmem>>, %arg10: memref<8x1xf32, #tpu.memory_space<vmem>>, %arg11: memref<1x8x256xf32, #tpu.memory_space<vmem>>) attributes {dimension_semantics = [#tpu.dimension_semantics<parallel>], iteration_bounds = array<i64: 2>, scalar_prefetch = 0 : i64, scratch_operands = 0 : i64, tpu.core_type = #tpu.core_type<tc>, window_params = [{transform_indices = @transform_0, window_bounds = array<i64: 1, 4, 64>}, {pipeline_mode = #tpu.pipeline_mode<synchronous>, transform_indices = @transform_1, window_bounds = array<i64: 64, 256>}, {pipeline_mode = #tpu.pipeline_mode<synchronous>, transform_indices = @transform_2, window_bounds = array<i64: 8, 36>}, {pipeline_mode = #tpu.pipeline_mode<synchronous>, transform_indices = @transform_3, window_bounds = array<i64: 8, 1>}, {pipeline_mode = #tpu.pipeline_mode<synchronous>, transform_indices = @transform_4, window_bounds = array<i64: 8, 72>}, {pipeline_mode = #tpu.pipeline_mode<synchronous>, transform_indices = @transform_5, window_bounds = array<i64: 8, 1>}, {transform_indices = @transform_6, window_bounds = array<i64: 1, 4, 256>}, {pipeline_mode = #tpu.pipeline_mode<synchronous>, transform_indices = @transform_7, window_bounds = array<i64: 8, 36>}, {pipeline_mode = #tpu.pipeline_mode<synchronous>, transform_indices = @transform_8, window_bounds = array<i64: 8, 72>}, {pipeline_mode = #tpu.pipeline_mode<synchronous>, transform_indices = @transform_9, window_bounds = array<i64: 8, 1>}, {transform_indices = @transform_10, window_bounds = array<i64: 1, 8, 256>}]} {
    %c0 = arith.constant 0 : index
    %c0_0 = arith.constant 0 : index
    %c0_1 = arith.constant 0 : index
    %0 = vector.load %arg1[%c0, %c0_0, %c0_1] : memref<1x4x64xf32, #tpu.memory_space<vmem>>, vector<1x4x64xf32>
    %1 = vector.shape_cast %0 : vector<1x4x64xf32> to vector<4x64xf32>
    %c0_2 = arith.constant 0 : index
    %c0_3 = arith.constant 0 : index
    %2 = vector.load %arg2[%c0_2, %c0_3] : memref<64x256xf32, #tpu.memory_space<vmem>>, vector<64x256xf32>
    %cst = arith.constant dense<0.000000e+00> : vector<4x256xf32>
    %3 = tpu.matmul %1, %2, %cst {dimension_numbers = #tpu.dot_dimension_numbers<[1], [0], [0], [1], [0, 0, 1, 1], [], []>} : vector<4x64xf32>, vector<64x256xf32>, vector<4x256xf32> -> vector<4x256xf32>
    %c0_4 = arith.constant 0 : index
    %c0_5 = arith.constant 0 : index
    %4 = vector.load %arg3[%c0_4, %c0_5] : memref<8x36xbf16, #tpu.memory_space<vmem>>, vector<8x36xbf16>
    %c0_6 = arith.constant 0 : index
    %c0_7 = arith.constant 0 : index
    %5 = vector.load %arg4[%c0_6, %c0_7] : memref<8x1xf32, #tpu.memory_space<vmem>>, vector<8x1xf32>
    %cst_8 = arith.constant 0.000000e+00 : f32
    %6 = vector.broadcast %cst_8 : f32 to vector<4x17xf32>
    %7 = tpu.concatenate %6, %3, %6 in 1 : vector<4x17xf32>, vector<4x256xf32>, vector<4x17xf32> -> vector<4x290xf32>
    %8 = tpu.iota {dimensions = array<i32: 1>} : vector<1x256xi32>
    %c16_i32 = arith.constant 16 : i32
    %c0_i32 = arith.constant 0 : i32
    %9 = arith.cmpi eq, %c16_i32, %c0_i32 : i32
    %c1_i32 = arith.constant 1 : i32
    %10 = arith.select %9, %c1_i32, %c16_i32 : i32
    %11 = vector.broadcast %10 : i32 to vector<1x256xi32>
    %12 = arith.remsi %8, %11 : vector<1x256xi32>
    %c0_i32_9 = arith.constant 0 : i32
    %13 = vector.broadcast %c0_i32_9 : i32 to vector<1x256xi32>
    %14 = arith.cmpi ne, %12, %13 : vector<1x256xi32>
    %c0_i32_10 = arith.constant 0 : i32
    %15 = vector.broadcast %c0_i32_10 : i32 to vector<1x256xi32>
    %16 = arith.cmpi slt, %12, %15 : vector<1x256xi32>
    %c0_i32_11 = arith.constant 0 : i32
    %17 = arith.cmpi slt, %10, %c0_i32_11 : i32
    %18 = vector.broadcast %17 : i1 to vector<1x256xi1>
    %19 = vector.broadcast %18 : vector<1x256xi1> to vector<1x256xi1>
    %20 = arith.xori %16, %19 : vector<1x256xi1>
    %21 = arith.andi %20, %14 : vector<1x256xi1>
    %22 = vector.broadcast %10 : i32 to vector<1x256xi32>
    %23 = arith.addi %12, %22 : vector<1x256xi32>
    %24 = arith.select %21, %23, %12 : vector<1x256xi1>, vector<1x256xi32>
    %25 = vector.extract_strided_slice %7 {offsets = [0, 0], sizes = [4, 256], strides = [1, 1]} : vector<4x290xf32> to vector<4x256xf32>
    %c-1_i32 = arith.constant -1 : i32
    %26 = vector.broadcast %c-1_i32 : i32 to vector<1x256xi32>
    %27 = arith.addi %24, %26 : vector<1x256xi32>
    %c0_i32_12 = arith.constant 0 : i32
    %28 = vector.broadcast %c0_i32_12 : i32 to vector<1x256xi32>
    %29 = arith.cmpi sge, %27, %28 : vector<1x256xi32>
    %c-1_i32_13 = arith.constant -1 : i32
    %30 = vector.broadcast %c-1_i32_13 : i32 to vector<1x256xi32>
    %31 = arith.addi %24, %30 : vector<1x256xi32>
    %c16_i32_14 = arith.constant 16 : i32
    %32 = vector.broadcast %c16_i32_14 : i32 to vector<1x256xi32>
    %33 = arith.cmpi slt, %31, %32 : vector<1x256xi32>
    %34 = arith.andi %29, %33 : vector<1x256xi1>
    %cst_15 = arith.constant 0.000000e+00 : f32
    %35 = vector.shape_cast %34 : vector<1x256xi1> to vector<1x256xi1>
    %36 = vector.broadcast %35 : vector<1x256xi1> to vector<4x256xi1>
    %37 = vector.broadcast %cst_15 : f32 to vector<4x256xf32>
    %38 = arith.select %36, %25, %37 : vector<4x256xi1>, vector<4x256xf32>
    %39 = vector.extract_strided_slice %7 {offsets = [0, 1], sizes = [4, 256], strides = [1, 1]} : vector<4x290xf32> to vector<4x256xf32>
    %40 = vector.extract_strided_slice %7 {offsets = [0, 2], sizes = [4, 256], strides = [1, 1]} : vector<4x290xf32> to vector<4x256xf32>
    %c1_i32_16 = arith.constant 1 : i32
    %41 = vector.broadcast %c1_i32_16 : i32 to vector<1x256xi32>
    %42 = arith.addi %24, %41 : vector<1x256xi32>
    %c0_i32_17 = arith.constant 0 : i32
    %43 = vector.broadcast %c0_i32_17 : i32 to vector<1x256xi32>
    %44 = arith.cmpi sge, %42, %43 : vector<1x256xi32>
    %c1_i32_18 = arith.constant 1 : i32
    %45 = vector.broadcast %c1_i32_18 : i32 to vector<1x256xi32>
    %46 = arith.addi %24, %45 : vector<1x256xi32>
    %c16_i32_19 = arith.constant 16 : i32
    %47 = vector.broadcast %c16_i32_19 : i32 to vector<1x256xi32>
    %48 = arith.cmpi slt, %46, %47 : vector<1x256xi32>
    %49 = arith.andi %44, %48 : vector<1x256xi1>
    %cst_20 = arith.constant 0.000000e+00 : f32
    %50 = vector.shape_cast %49 : vector<1x256xi1> to vector<1x256xi1>
    %51 = vector.broadcast %50 : vector<1x256xi1> to vector<4x256xi1>
    %52 = vector.broadcast %cst_20 : f32 to vector<4x256xf32>
    %53 = arith.select %51, %40, %52 : vector<4x256xi1>, vector<4x256xf32>
    %54 = vector.extract_strided_slice %7 {offsets = [0, 16], sizes = [4, 256], strides = [1, 1]} : vector<4x290xf32> to vector<4x256xf32>
    %c-1_i32_21 = arith.constant -1 : i32
    %55 = vector.broadcast %c-1_i32_21 : i32 to vector<1x256xi32>
    %56 = arith.addi %24, %55 : vector<1x256xi32>
    %c0_i32_22 = arith.constant 0 : i32
    %57 = vector.broadcast %c0_i32_22 : i32 to vector<1x256xi32>
    %58 = arith.cmpi sge, %56, %57 : vector<1x256xi32>
    %c-1_i32_23 = arith.constant -1 : i32
    %59 = vector.broadcast %c-1_i32_23 : i32 to vector<1x256xi32>
    %60 = arith.addi %24, %59 : vector<1x256xi32>
    %c16_i32_24 = arith.constant 16 : i32
    %61 = vector.broadcast %c16_i32_24 : i32 to vector<1x256xi32>
    %62 = arith.cmpi slt, %60, %61 : vector<1x256xi32>
    %63 = arith.andi %58, %62 : vector<1x256xi1>
    %cst_25 = arith.constant 0.000000e+00 : f32
    %64 = vector.shape_cast %63 : vector<1x256xi1> to vector<1x256xi1>
    %65 = vector.broadcast %64 : vector<1x256xi1> to vector<4x256xi1>
    %66 = vector.broadcast %cst_25 : f32 to vector<4x256xf32>
    %67 = arith.select %65, %54, %66 : vector<4x256xi1>, vector<4x256xf32>
    %68 = vector.extract_strided_slice %7 {offsets = [0, 17], sizes = [4, 256], strides = [1, 1]} : vector<4x290xf32> to vector<4x256xf32>
    %69 = vector.extract_strided_slice %7 {offsets = [0, 18], sizes = [4, 256], strides = [1, 1]} : vector<4x290xf32> to vector<4x256xf32>
    %c1_i32_26 = arith.constant 1 : i32
    %70 = vector.broadcast %c1_i32_26 : i32 to vector<1x256xi32>
    %71 = arith.addi %24, %70 : vector<1x256xi32>
    %c0_i32_27 = arith.constant 0 : i32
    %72 = vector.broadcast %c0_i32_27 : i32 to vector<1x256xi32>
    %73 = arith.cmpi sge, %71, %72 : vector<1x256xi32>
    %c1_i32_28 = arith.constant 1 : i32
    %74 = vector.broadcast %c1_i32_28 : i32 to vector<1x256xi32>
    %75 = arith.addi %24, %74 : vector<1x256xi32>
    %c16_i32_29 = arith.constant 16 : i32
    %76 = vector.broadcast %c16_i32_29 : i32 to vector<1x256xi32>
    %77 = arith.cmpi slt, %75, %76 : vector<1x256xi32>
    %78 = arith.andi %73, %77 : vector<1x256xi1>
    %cst_30 = arith.constant 0.000000e+00 : f32
    %79 = vector.shape_cast %78 : vector<1x256xi1> to vector<1x256xi1>
    %80 = vector.broadcast %79 : vector<1x256xi1> to vector<4x256xi1>
    %81 = vector.broadcast %cst_30 : f32 to vector<4x256xf32>
    %82 = arith.select %80, %69, %81 : vector<4x256xi1>, vector<4x256xf32>
    %83 = vector.extract_strided_slice %7 {offsets = [0, 32], sizes = [4, 256], strides = [1, 1]} : vector<4x290xf32> to vector<4x256xf32>
    %c-1_i32_31 = arith.constant -1 : i32
    %84 = vector.broadcast %c-1_i32_31 : i32 to vector<1x256xi32>
    %85 = arith.addi %24, %84 : vector<1x256xi32>
    %c0_i32_32 = arith.constant 0 : i32
    %86 = vector.broadcast %c0_i32_32 : i32 to vector<1x256xi32>
    %87 = arith.cmpi sge, %85, %86 : vector<1x256xi32>
    %c-1_i32_33 = arith.constant -1 : i32
    %88 = vector.broadcast %c-1_i32_33 : i32 to vector<1x256xi32>
    %89 = arith.addi %24, %88 : vector<1x256xi32>
    %c16_i32_34 = arith.constant 16 : i32
    %90 = vector.broadcast %c16_i32_34 : i32 to vector<1x256xi32>
    %91 = arith.cmpi slt, %89, %90 : vector<1x256xi32>
    %92 = arith.andi %87, %91 : vector<1x256xi1>
    %cst_35 = arith.constant 0.000000e+00 : f32
    %93 = vector.shape_cast %92 : vector<1x256xi1> to vector<1x256xi1>
    %94 = vector.broadcast %93 : vector<1x256xi1> to vector<4x256xi1>
    %95 = vector.broadcast %cst_35 : f32 to vector<4x256xf32>
    %96 = arith.select %94, %83, %95 : vector<4x256xi1>, vector<4x256xf32>
    %97 = vector.extract_strided_slice %7 {offsets = [0, 33], sizes = [4, 256], strides = [1, 1]} : vector<4x290xf32> to vector<4x256xf32>
    %98 = vector.extract_strided_slice %7 {offsets = [0, 34], sizes = [4, 256], strides = [1, 1]} : vector<4x290xf32> to vector<4x256xf32>
    %c1_i32_36 = arith.constant 1 : i32
    %99 = vector.broadcast %c1_i32_36 : i32 to vector<1x256xi32>
    %100 = arith.addi %24, %99 : vector<1x256xi32>
    %c0_i32_37 = arith.constant 0 : i32
    %101 = vector.broadcast %c0_i32_37 : i32 to vector<1x256xi32>
    %102 = arith.cmpi sge, %100, %101 : vector<1x256xi32>
    %c1_i32_38 = arith.constant 1 : i32
    %103 = vector.broadcast %c1_i32_38 : i32 to vector<1x256xi32>
    %104 = arith.addi %24, %103 : vector<1x256xi32>
    %c16_i32_39 = arith.constant 16 : i32
    %105 = vector.broadcast %c16_i32_39 : i32 to vector<1x256xi32>
    %106 = arith.cmpi slt, %104, %105 : vector<1x256xi32>
    %107 = arith.andi %102, %106 : vector<1x256xi1>
    %cst_40 = arith.constant 0.000000e+00 : f32
    %108 = vector.shape_cast %107 : vector<1x256xi1> to vector<1x256xi1>
    %109 = vector.broadcast %108 : vector<1x256xi1> to vector<4x256xi1>
    %110 = vector.broadcast %cst_40 : f32 to vector<4x256xf32>
    %111 = arith.select %109, %98, %110 : vector<4x256xi1>, vector<4x256xf32>
    %112 = tpu.concatenate %38, %39, %53, %67, %68, %82, %96, %97, %111 in 0 : vector<4x256xf32>, vector<4x256xf32>, vector<4x256xf32>, vector<4x256xf32>, vector<4x256xf32>, vector<4x256xf32>, vector<4x256xf32>, vector<4x256xf32>, vector<4x256xf32> -> vector<36x256xf32>
    %113 = arith.truncf %112 : vector<36x256xf32> to vector<36x256xbf16>
    %cst_41 = arith.constant dense<0.000000e+00> : vector<8x256xf32>
    %114 = tpu.matmul %4, %113, %cst_41 {dimension_numbers = #tpu.dot_dimension_numbers<[1], [0], [0], [1], [0, 0, 1, 1], [], []>} : vector<8x36xbf16>, vector<36x256xbf16>, vector<8x256xf32> -> vector<8x256xf32>
    %115 = vector.broadcast %5 : vector<8x1xf32> to vector<8x256xf32>
    %116 = arith.addf %114, %115 : vector<8x256xf32>
    %cst_42 = arith.constant 0.000000e+00 : f32
    %117 = vector.broadcast %cst_42 : f32 to vector<8x256xf32>
    %118 = arith.cmpf oge, %116, %117 : vector<8x256xf32>
    %cst_43 = arith.constant 0.00999999977 : f32
    %119 = vector.broadcast %cst_43 : f32 to vector<8x256xf32>
    %120 = arith.mulf %119, %116 : vector<8x256xf32>
    %121 = arith.select %118, %116, %120 : vector<8x256xi1>, vector<8x256xf32>
    %c0_44 = arith.constant 0 : index
    %c0_45 = arith.constant 0 : index
    %122 = vector.load %arg5[%c0_44, %c0_45] : memref<8x72xbf16, #tpu.memory_space<vmem>>, vector<8x72xbf16>
    %c0_46 = arith.constant 0 : index
    %c0_47 = arith.constant 0 : index
    %123 = vector.load %arg6[%c0_46, %c0_47] : memref<8x1xf32, #tpu.memory_space<vmem>>, vector<8x1xf32>
    %cst_48 = arith.constant 0.000000e+00 : f32
    %124 = vector.broadcast %cst_48 : f32 to vector<8x17xf32>
    %125 = tpu.concatenate %124, %121, %124 in 1 : vector<8x17xf32>, vector<8x256xf32>, vector<8x17xf32> -> vector<8x290xf32>
    %126 = tpu.iota {dimensions = array<i32: 1>} : vector<1x256xi32>
    %c16_i32_49 = arith.constant 16 : i32
    %c0_i32_50 = arith.constant 0 : i32
    %127 = arith.cmpi eq, %c16_i32_49, %c0_i32_50 : i32
    %c1_i32_51 = arith.constant 1 : i32
    %128 = arith.select %127, %c1_i32_51, %c16_i32_49 : i32
    %129 = vector.broadcast %128 : i32 to vector<1x256xi32>
    %130 = arith.remsi %126, %129 : vector<1x256xi32>
    %c0_i32_52 = arith.constant 0 : i32
    %131 = vector.broadcast %c0_i32_52 : i32 to vector<1x256xi32>
    %132 = arith.cmpi ne, %130, %131 : vector<1x256xi32>
    %c0_i32_53 = arith.constant 0 : i32
    %133 = vector.broadcast %c0_i32_53 : i32 to vector<1x256xi32>
    %134 = arith.cmpi slt, %130, %133 : vector<1x256xi32>
    %c0_i32_54 = arith.constant 0 : i32
    %135 = arith.cmpi slt, %128, %c0_i32_54 : i32
    %136 = vector.broadcast %135 : i1 to vector<1x256xi1>
    %137 = vector.broadcast %136 : vector<1x256xi1> to vector<1x256xi1>
    %138 = arith.xori %134, %137 : vector<1x256xi1>
    %139 = arith.andi %138, %132 : vector<1x256xi1>
    %140 = vector.broadcast %128 : i32 to vector<1x256xi32>
    %141 = arith.addi %130, %140 : vector<1x256xi32>
    %142 = arith.select %139, %141, %130 : vector<1x256xi1>, vector<1x256xi32>
    %143 = vector.extract_strided_slice %125 {offsets = [0, 0], sizes = [8, 256], strides = [1, 1]} : vector<8x290xf32> to vector<8x256xf32>
    %c-1_i32_55 = arith.constant -1 : i32
    %144 = vector.broadcast %c-1_i32_55 : i32 to vector<1x256xi32>
    %145 = arith.addi %142, %144 : vector<1x256xi32>
    %c0_i32_56 = arith.constant 0 : i32
    %146 = vector.broadcast %c0_i32_56 : i32 to vector<1x256xi32>
    %147 = arith.cmpi sge, %145, %146 : vector<1x256xi32>
    %c-1_i32_57 = arith.constant -1 : i32
    %148 = vector.broadcast %c-1_i32_57 : i32 to vector<1x256xi32>
    %149 = arith.addi %142, %148 : vector<1x256xi32>
    %c16_i32_58 = arith.constant 16 : i32
    %150 = vector.broadcast %c16_i32_58 : i32 to vector<1x256xi32>
    %151 = arith.cmpi slt, %149, %150 : vector<1x256xi32>
    %152 = arith.andi %147, %151 : vector<1x256xi1>
    %cst_59 = arith.constant 0.000000e+00 : f32
    %153 = vector.shape_cast %152 : vector<1x256xi1> to vector<1x256xi1>
    %154 = vector.broadcast %153 : vector<1x256xi1> to vector<8x256xi1>
    %155 = vector.broadcast %cst_59 : f32 to vector<8x256xf32>
    %156 = arith.select %154, %143, %155 : vector<8x256xi1>, vector<8x256xf32>
    %157 = vector.extract_strided_slice %125 {offsets = [0, 1], sizes = [8, 256], strides = [1, 1]} : vector<8x290xf32> to vector<8x256xf32>
    %158 = vector.extract_strided_slice %125 {offsets = [0, 2], sizes = [8, 256], strides = [1, 1]} : vector<8x290xf32> to vector<8x256xf32>
    %c1_i32_60 = arith.constant 1 : i32
    %159 = vector.broadcast %c1_i32_60 : i32 to vector<1x256xi32>
    %160 = arith.addi %142, %159 : vector<1x256xi32>
    %c0_i32_61 = arith.constant 0 : i32
    %161 = vector.broadcast %c0_i32_61 : i32 to vector<1x256xi32>
    %162 = arith.cmpi sge, %160, %161 : vector<1x256xi32>
    %c1_i32_62 = arith.constant 1 : i32
    %163 = vector.broadcast %c1_i32_62 : i32 to vector<1x256xi32>
    %164 = arith.addi %142, %163 : vector<1x256xi32>
    %c16_i32_63 = arith.constant 16 : i32
    %165 = vector.broadcast %c16_i32_63 : i32 to vector<1x256xi32>
    %166 = arith.cmpi slt, %164, %165 : vector<1x256xi32>
    %167 = arith.andi %162, %166 : vector<1x256xi1>
    %cst_64 = arith.constant 0.000000e+00 : f32
    %168 = vector.shape_cast %167 : vector<1x256xi1> to vector<1x256xi1>
    %169 = vector.broadcast %168 : vector<1x256xi1> to vector<8x256xi1>
    %170 = vector.broadcast %cst_64 : f32 to vector<8x256xf32>
    %171 = arith.select %169, %158, %170 : vector<8x256xi1>, vector<8x256xf32>
    %172 = vector.extract_strided_slice %125 {offsets = [0, 16], sizes = [8, 256], strides = [1, 1]} : vector<8x290xf32> to vector<8x256xf32>
    %c-1_i32_65 = arith.constant -1 : i32
    %173 = vector.broadcast %c-1_i32_65 : i32 to vector<1x256xi32>
    %174 = arith.addi %142, %173 : vector<1x256xi32>
    %c0_i32_66 = arith.constant 0 : i32
    %175 = vector.broadcast %c0_i32_66 : i32 to vector<1x256xi32>
    %176 = arith.cmpi sge, %174, %175 : vector<1x256xi32>
    %c-1_i32_67 = arith.constant -1 : i32
    %177 = vector.broadcast %c-1_i32_67 : i32 to vector<1x256xi32>
    %178 = arith.addi %142, %177 : vector<1x256xi32>
    %c16_i32_68 = arith.constant 16 : i32
    %179 = vector.broadcast %c16_i32_68 : i32 to vector<1x256xi32>
    %180 = arith.cmpi slt, %178, %179 : vector<1x256xi32>
    %181 = arith.andi %176, %180 : vector<1x256xi1>
    %cst_69 = arith.constant 0.000000e+00 : f32
    %182 = vector.shape_cast %181 : vector<1x256xi1> to vector<1x256xi1>
    %183 = vector.broadcast %182 : vector<1x256xi1> to vector<8x256xi1>
    %184 = vector.broadcast %cst_69 : f32 to vector<8x256xf32>
    %185 = arith.select %183, %172, %184 : vector<8x256xi1>, vector<8x256xf32>
    %186 = vector.extract_strided_slice %125 {offsets = [0, 17], sizes = [8, 256], strides = [1, 1]} : vector<8x290xf32> to vector<8x256xf32>
    %187 = vector.extract_strided_slice %125 {offsets = [0, 18], sizes = [8, 256], strides = [1, 1]} : vector<8x290xf32> to vector<8x256xf32>
    %c1_i32_70 = arith.constant 1 : i32
    %188 = vector.broadcast %c1_i32_70 : i32 to vector<1x256xi32>
    %189 = arith.addi %142, %188 : vector<1x256xi32>
    %c0_i32_71 = arith.constant 0 : i32
    %190 = vector.broadcast %c0_i32_71 : i32 to vector<1x256xi32>
    %191 = arith.cmpi sge, %189, %190 : vector<1x256xi32>
    %c1_i32_72 = arith.constant 1 : i32
    %192 = vector.broadcast %c1_i32_72 : i32 to vector<1x256xi32>
    %193 = arith.addi %142, %192 : vector<1x256xi32>
    %c16_i32_73 = arith.constant 16 : i32
    %194 = vector.broadcast %c16_i32_73 : i32 to vector<1x256xi32>
    %195 = arith.cmpi slt, %193, %194 : vector<1x256xi32>
    %196 = arith.andi %191, %195 : vector<1x256xi1>
    %cst_74 = arith.constant 0.000000e+00 : f32
    %197 = vector.shape_cast %196 : vector<1x256xi1> to vector<1x256xi1>
    %198 = vector.broadcast %197 : vector<1x256xi1> to vector<8x256xi1>
    %199 = vector.broadcast %cst_74 : f32 to vector<8x256xf32>
    %200 = arith.select %198, %187, %199 : vector<8x256xi1>, vector<8x256xf32>
    %201 = vector.extract_strided_slice %125 {offsets = [0, 32], sizes = [8, 256], strides = [1, 1]} : vector<8x290xf32> to vector<8x256xf32>
    %c-1_i32_75 = arith.constant -1 : i32
    %202 = vector.broadcast %c-1_i32_75 : i32 to vector<1x256xi32>
    %203 = arith.addi %142, %202 : vector<1x256xi32>
    %c0_i32_76 = arith.constant 0 : i32
    %204 = vector.broadcast %c0_i32_76 : i32 to vector<1x256xi32>
    %205 = arith.cmpi sge, %203, %204 : vector<1x256xi32>
    %c-1_i32_77 = arith.constant -1 : i32
    %206 = vector.broadcast %c-1_i32_77 : i32 to vector<1x256xi32>
    %207 = arith.addi %142, %206 : vector<1x256xi32>
    %c16_i32_78 = arith.constant 16 : i32
    %208 = vector.broadcast %c16_i32_78 : i32 to vector<1x256xi32>
    %209 = arith.cmpi slt, %207, %208 : vector<1x256xi32>
    %210 = arith.andi %205, %209 : vector<1x256xi1>
    %cst_79 = arith.constant 0.000000e+00 : f32
    %211 = vector.shape_cast %210 : vector<1x256xi1> to vector<1x256xi1>
    %212 = vector.broadcast %211 : vector<1x256xi1> to vector<8x256xi1>
    %213 = vector.broadcast %cst_79 : f32 to vector<8x256xf32>
    %214 = arith.select %212, %201, %213 : vector<8x256xi1>, vector<8x256xf32>
    %215 = vector.extract_strided_slice %125 {offsets = [0, 33], sizes = [8, 256], strides = [1, 1]} : vector<8x290xf32> to vector<8x256xf32>
    %216 = vector.extract_strided_slice %125 {offsets = [0, 34], sizes = [8, 256], strides = [1, 1]} : vector<8x290xf32> to vector<8x256xf32>
    %c1_i32_80 = arith.constant 1 : i32
    %217 = vector.broadcast %c1_i32_80 : i32 to vector<1x256xi32>
    %218 = arith.addi %142, %217 : vector<1x256xi32>
    %c0_i32_81 = arith.constant 0 : i32
    %219 = vector.broadcast %c0_i32_81 : i32 to vector<1x256xi32>
    %220 = arith.cmpi sge, %218, %219 : vector<1x256xi32>
    %c1_i32_82 = arith.constant 1 : i32
    %221 = vector.broadcast %c1_i32_82 : i32 to vector<1x256xi32>
    %222 = arith.addi %142, %221 : vector<1x256xi32>
    %c16_i32_83 = arith.constant 16 : i32
    %223 = vector.broadcast %c16_i32_83 : i32 to vector<1x256xi32>
    %224 = arith.cmpi slt, %222, %223 : vector<1x256xi32>
    %225 = arith.andi %220, %224 : vector<1x256xi1>
    %cst_84 = arith.constant 0.000000e+00 : f32
    %226 = vector.shape_cast %225 : vector<1x256xi1> to vector<1x256xi1>
    %227 = vector.broadcast %226 : vector<1x256xi1> to vector<8x256xi1>
    %228 = vector.broadcast %cst_84 : f32 to vector<8x256xf32>
    %229 = arith.select %227, %216, %228 : vector<8x256xi1>, vector<8x256xf32>
    %230 = tpu.concatenate %156, %157, %171, %185, %186, %200, %214, %215, %229 in 0 : vector<8x256xf32>, vector<8x256xf32>, vector<8x256xf32>, vector<8x256xf32>, vector<8x256xf32>, vector<8x256xf32>, vector<8x256xf32>, vector<8x256xf32>, vector<8x256xf32> -> vector<72x256xf32>
    %231 = arith.truncf %230 : vector<72x256xf32> to vector<72x256xbf16>
    %cst_85 = arith.constant dense<0.000000e+00> : vector<8x256xf32>
    %232 = tpu.matmul %122, %231, %cst_85 {dimension_numbers = #tpu.dot_dimension_numbers<[1], [0], [0], [1], [0, 0, 1, 1], [], []>} : vector<8x72xbf16>, vector<72x256xbf16>, vector<8x256xf32> -> vector<8x256xf32>
    %233 = vector.broadcast %123 : vector<8x1xf32> to vector<8x256xf32>
    %234 = arith.addf %232, %233 : vector<8x256xf32>
    %cst_86 = arith.constant 0.000000e+00 : f32
    %235 = vector.broadcast %cst_86 : f32 to vector<8x256xf32>
    %236 = arith.cmpf oge, %234, %235 : vector<8x256xf32>
    %cst_87 = arith.constant 0.00999999977 : f32
    %237 = vector.broadcast %cst_87 : f32 to vector<8x256xf32>
    %238 = arith.mulf %237, %234 : vector<8x256xf32>
    %239 = arith.select %236, %234, %238 : vector<8x256xi1>, vector<8x256xf32>
    %c0_88 = arith.constant 0 : index
    %c0_89 = arith.constant 0 : index
    %240 = vector.load %arg9[%c0_88, %c0_89] : memref<8x72xbf16, #tpu.memory_space<vmem>>, vector<8x72xbf16>
    %cst_90 = arith.constant 0.000000e+00 : f32
    %241 = vector.broadcast %cst_90 : f32 to vector<8x17xf32>
    %242 = tpu.concatenate %241, %239, %241 in 1 : vector<8x17xf32>, vector<8x256xf32>, vector<8x17xf32> -> vector<8x290xf32>
    %243 = tpu.iota {dimensions = array<i32: 1>} : vector<1x256xi32>
    %c16_i32_91 = arith.constant 16 : i32
    %c0_i32_92 = arith.constant 0 : i32
    %244 = arith.cmpi eq, %c16_i32_91, %c0_i32_92 : i32
    %c1_i32_93 = arith.constant 1 : i32
    %245 = arith.select %244, %c1_i32_93, %c16_i32_91 : i32
    %246 = vector.broadcast %245 : i32 to vector<1x256xi32>
    %247 = arith.remsi %243, %246 : vector<1x256xi32>
    %c0_i32_94 = arith.constant 0 : i32
    %248 = vector.broadcast %c0_i32_94 : i32 to vector<1x256xi32>
    %249 = arith.cmpi ne, %247, %248 : vector<1x256xi32>
    %c0_i32_95 = arith.constant 0 : i32
    %250 = vector.broadcast %c0_i32_95 : i32 to vector<1x256xi32>
    %251 = arith.cmpi slt, %247, %250 : vector<1x256xi32>
    %c0_i32_96 = arith.constant 0 : i32
    %252 = arith.cmpi slt, %245, %c0_i32_96 : i32
    %253 = vector.broadcast %252 : i1 to vector<1x256xi1>
    %254 = vector.broadcast %253 : vector<1x256xi1> to vector<1x256xi1>
    %255 = arith.xori %251, %254 : vector<1x256xi1>
    %256 = arith.andi %255, %249 : vector<1x256xi1>
    %257 = vector.broadcast %245 : i32 to vector<1x256xi32>
    %258 = arith.addi %247, %257 : vector<1x256xi32>
    %259 = arith.select %256, %258, %247 : vector<1x256xi1>, vector<1x256xi32>
    %260 = vector.extract_strided_slice %242 {offsets = [0, 0], sizes = [8, 256], strides = [1, 1]} : vector<8x290xf32> to vector<8x256xf32>
    %c-1_i32_97 = arith.constant -1 : i32
    %261 = vector.broadcast %c-1_i32_97 : i32 to vector<1x256xi32>
    %262 = arith.addi %259, %261 : vector<1x256xi32>
    %c0_i32_98 = arith.constant 0 : i32
    %263 = vector.broadcast %c0_i32_98 : i32 to vector<1x256xi32>
    %264 = arith.cmpi sge, %262, %263 : vector<1x256xi32>
    %c-1_i32_99 = arith.constant -1 : i32
    %265 = vector.broadcast %c-1_i32_99 : i32 to vector<1x256xi32>
    %266 = arith.addi %259, %265 : vector<1x256xi32>
    %c16_i32_100 = arith.constant 16 : i32
    %267 = vector.broadcast %c16_i32_100 : i32 to vector<1x256xi32>
    %268 = arith.cmpi slt, %266, %267 : vector<1x256xi32>
    %269 = arith.andi %264, %268 : vector<1x256xi1>
    %cst_101 = arith.constant 0.000000e+00 : f32
    %270 = vector.shape_cast %269 : vector<1x256xi1> to vector<1x256xi1>
    %271 = vector.broadcast %270 : vector<1x256xi1> to vector<8x256xi1>
    %272 = vector.broadcast %cst_101 : f32 to vector<8x256xf32>
    %273 = arith.select %271, %260, %272 : vector<8x256xi1>, vector<8x256xf32>
    %274 = vector.extract_strided_slice %242 {offsets = [0, 1], sizes = [8, 256], strides = [1, 1]} : vector<8x290xf32> to vector<8x256xf32>
    %275 = vector.extract_strided_slice %242 {offsets = [0, 2], sizes = [8, 256], strides = [1, 1]} : vector<8x290xf32> to vector<8x256xf32>
    %c1_i32_102 = arith.constant 1 : i32
    %276 = vector.broadcast %c1_i32_102 : i32 to vector<1x256xi32>
    %277 = arith.addi %259, %276 : vector<1x256xi32>
    %c0_i32_103 = arith.constant 0 : i32
    %278 = vector.broadcast %c0_i32_103 : i32 to vector<1x256xi32>
    %279 = arith.cmpi sge, %277, %278 : vector<1x256xi32>
    %c1_i32_104 = arith.constant 1 : i32
    %280 = vector.broadcast %c1_i32_104 : i32 to vector<1x256xi32>
    %281 = arith.addi %259, %280 : vector<1x256xi32>
    %c16_i32_105 = arith.constant 16 : i32
    %282 = vector.broadcast %c16_i32_105 : i32 to vector<1x256xi32>
    %283 = arith.cmpi slt, %281, %282 : vector<1x256xi32>
    %284 = arith.andi %279, %283 : vector<1x256xi1>
    %cst_106 = arith.constant 0.000000e+00 : f32
    %285 = vector.shape_cast %284 : vector<1x256xi1> to vector<1x256xi1>
    %286 = vector.broadcast %285 : vector<1x256xi1> to vector<8x256xi1>
    %287 = vector.broadcast %cst_106 : f32 to vector<8x256xf32>
    %288 = arith.select %286, %275, %287 : vector<8x256xi1>, vector<8x256xf32>
    %289 = vector.extract_strided_slice %242 {offsets = [0, 16], sizes = [8, 256], strides = [1, 1]} : vector<8x290xf32> to vector<8x256xf32>
    %c-1_i32_107 = arith.constant -1 : i32
    %290 = vector.broadcast %c-1_i32_107 : i32 to vector<1x256xi32>
    %291 = arith.addi %259, %290 : vector<1x256xi32>
    %c0_i32_108 = arith.constant 0 : i32
    %292 = vector.broadcast %c0_i32_108 : i32 to vector<1x256xi32>
    %293 = arith.cmpi sge, %291, %292 : vector<1x256xi32>
    %c-1_i32_109 = arith.constant -1 : i32
    %294 = vector.broadcast %c-1_i32_109 : i32 to vector<1x256xi32>
    %295 = arith.addi %259, %294 : vector<1x256xi32>
    %c16_i32_110 = arith.constant 16 : i32
    %296 = vector.broadcast %c16_i32_110 : i32 to vector<1x256xi32>
    %297 = arith.cmpi slt, %295, %296 : vector<1x256xi32>
    %298 = arith.andi %293, %297 : vector<1x256xi1>
    %cst_111 = arith.constant 0.000000e+00 : f32
    %299 = vector.shape_cast %298 : vector<1x256xi1> to vector<1x256xi1>
    %300 = vector.broadcast %299 : vector<1x256xi1> to vector<8x256xi1>
    %301 = vector.broadcast %cst_111 : f32 to vector<8x256xf32>
    %302 = arith.select %300, %289, %301 : vector<8x256xi1>, vector<8x256xf32>
    %303 = vector.extract_strided_slice %242 {offsets = [0, 17], sizes = [8, 256], strides = [1, 1]} : vector<8x290xf32> to vector<8x256xf32>
    %304 = vector.extract_strided_slice %242 {offsets = [0, 18], sizes = [8, 256], strides = [1, 1]} : vector<8x290xf32> to vector<8x256xf32>
    %c1_i32_112 = arith.constant 1 : i32
    %305 = vector.broadcast %c1_i32_112 : i32 to vector<1x256xi32>
    %306 = arith.addi %259, %305 : vector<1x256xi32>
    %c0_i32_113 = arith.constant 0 : i32
    %307 = vector.broadcast %c0_i32_113 : i32 to vector<1x256xi32>
    %308 = arith.cmpi sge, %306, %307 : vector<1x256xi32>
    %c1_i32_114 = arith.constant 1 : i32
    %309 = vector.broadcast %c1_i32_114 : i32 to vector<1x256xi32>
    %310 = arith.addi %259, %309 : vector<1x256xi32>
    %c16_i32_115 = arith.constant 16 : i32
    %311 = vector.broadcast %c16_i32_115 : i32 to vector<1x256xi32>
    %312 = arith.cmpi slt, %310, %311 : vector<1x256xi32>
    %313 = arith.andi %308, %312 : vector<1x256xi1>
    %cst_116 = arith.constant 0.000000e+00 : f32
    %314 = vector.shape_cast %313 : vector<1x256xi1> to vector<1x256xi1>
    %315 = vector.broadcast %314 : vector<1x256xi1> to vector<8x256xi1>
    %316 = vector.broadcast %cst_116 : f32 to vector<8x256xf32>
    %317 = arith.select %315, %304, %316 : vector<8x256xi1>, vector<8x256xf32>
    %318 = vector.extract_strided_slice %242 {offsets = [0, 32], sizes = [8, 256], strides = [1, 1]} : vector<8x290xf32> to vector<8x256xf32>
    %c-1_i32_117 = arith.constant -1 : i32
    %319 = vector.broadcast %c-1_i32_117 : i32 to vector<1x256xi32>
    %320 = arith.addi %259, %319 : vector<1x256xi32>
    %c0_i32_118 = arith.constant 0 : i32
    %321 = vector.broadcast %c0_i32_118 : i32 to vector<1x256xi32>
    %322 = arith.cmpi sge, %320, %321 : vector<1x256xi32>
    %c-1_i32_119 = arith.constant -1 : i32
    %323 = vector.broadcast %c-1_i32_119 : i32 to vector<1x256xi32>
    %324 = arith.addi %259, %323 : vector<1x256xi32>
    %c16_i32_120 = arith.constant 16 : i32
    %325 = vector.broadcast %c16_i32_120 : i32 to vector<1x256xi32>
    %326 = arith.cmpi slt, %324, %325 : vector<1x256xi32>
    %327 = arith.andi %322, %326 : vector<1x256xi1>
    %cst_121 = arith.constant 0.000000e+00 : f32
    %328 = vector.shape_cast %327 : vector<1x256xi1> to vector<1x256xi1>
    %329 = vector.broadcast %328 : vector<1x256xi1> to vector<8x256xi1>
    %330 = vector.broadcast %cst_121 : f32 to vector<8x256xf32>
    %331 = arith.select %329, %318, %330 : vector<8x256xi1>, vector<8x256xf32>
    %332 = vector.extract_strided_slice %242 {offsets = [0, 33], sizes = [8, 256], strides = [1, 1]} : vector<8x290xf32> to vector<8x256xf32>
    %333 = vector.extract_strided_slice %242 {offsets = [0, 34], sizes = [8, 256], strides = [1, 1]} : vector<8x290xf32> to vector<8x256xf32>
    %c1_i32_122 = arith.constant 1 : i32
    %334 = vector.broadcast %c1_i32_122 : i32 to vector<1x256xi32>
    %335 = arith.addi %259, %334 : vector<1x256xi32>
    %c0_i32_123 = arith.constant 0 : i32
    %336 = vector.broadcast %c0_i32_123 : i32 to vector<1x256xi32>
    %337 = arith.cmpi sge, %335, %336 : vector<1x256xi32>
    %c1_i32_124 = arith.constant 1 : i32
    %338 = vector.broadcast %c1_i32_124 : i32 to vector<1x256xi32>
    %339 = arith.addi %259, %338 : vector<1x256xi32>
    %c16_i32_125 = arith.constant 16 : i32
    %340 = vector.broadcast %c16_i32_125 : i32 to vector<1x256xi32>
    %341 = arith.cmpi slt, %339, %340 : vector<1x256xi32>
    %342 = arith.andi %337, %341 : vector<1x256xi1>
    %cst_126 = arith.constant 0.000000e+00 : f32
    %343 = vector.shape_cast %342 : vector<1x256xi1> to vector<1x256xi1>
    %344 = vector.broadcast %343 : vector<1x256xi1> to vector<8x256xi1>
    %345 = vector.broadcast %cst_126 : f32 to vector<8x256xf32>
    %346 = arith.select %344, %333, %345 : vector<8x256xi1>, vector<8x256xf32>
    %347 = tpu.concatenate %273, %274, %288, %302, %303, %317, %331, %332, %346 in 0 : vector<8x256xf32>, vector<8x256xf32>, vector<8x256xf32>, vector<8x256xf32>, vector<8x256xf32>, vector<8x256xf32>, vector<8x256xf32>, vector<8x256xf32>, vector<8x256xf32> -> vector<72x256xf32>
    %348 = arith.truncf %347 : vector<72x256xf32> to vector<72x256xbf16>
    %cst_127 = arith.constant dense<0.000000e+00> : vector<8x256xf32>
    %349 = tpu.matmul %240, %348, %cst_127 {dimension_numbers = #tpu.dot_dimension_numbers<[1], [0], [0], [1], [0, 0, 1, 1], [], []>} : vector<8x72xbf16>, vector<72x256xbf16>, vector<8x256xf32> -> vector<8x256xf32>
    %c0_128 = arith.constant 0 : index
    %c0_129 = arith.constant 0 : index
    %350 = vector.load %arg8[%c0_128, %c0_129] : memref<8x36xbf16, #tpu.memory_space<vmem>>, vector<8x36xbf16>
    %c0_130 = arith.constant 0 : index
    %c0_131 = arith.constant 0 : index
    %c0_132 = arith.constant 0 : index
    %351 = vector.load %arg7[%c0_130, %c0_131, %c0_132] : memref<1x4x256xf32, #tpu.memory_space<vmem>>, vector<1x4x256xf32>
    %352 = vector.shape_cast %351 : vector<1x4x256xf32> to vector<4x256xf32>
    %cst_133 = arith.constant 0.000000e+00 : f32
    %353 = vector.broadcast %cst_133 : f32 to vector<4x17xf32>
    %354 = tpu.concatenate %353, %352, %353 in 1 : vector<4x17xf32>, vector<4x256xf32>, vector<4x17xf32> -> vector<4x290xf32>
    %355 = tpu.iota {dimensions = array<i32: 1>} : vector<1x256xi32>
    %c16_i32_134 = arith.constant 16 : i32
    %c0_i32_135 = arith.constant 0 : i32
    %356 = arith.cmpi eq, %c16_i32_134, %c0_i32_135 : i32
    %c1_i32_136 = arith.constant 1 : i32
    %357 = arith.select %356, %c1_i32_136, %c16_i32_134 : i32
    %358 = vector.broadcast %357 : i32 to vector<1x256xi32>
    %359 = arith.remsi %355, %358 : vector<1x256xi32>
    %c0_i32_137 = arith.constant 0 : i32
    %360 = vector.broadcast %c0_i32_137 : i32 to vector<1x256xi32>
    %361 = arith.cmpi ne, %359, %360 : vector<1x256xi32>
    %c0_i32_138 = arith.constant 0 : i32
    %362 = vector.broadcast %c0_i32_138 : i32 to vector<1x256xi32>
    %363 = arith.cmpi slt, %359, %362 : vector<1x256xi32>
    %c0_i32_139 = arith.constant 0 : i32
    %364 = arith.cmpi slt, %357, %c0_i32_139 : i32
    %365 = vector.broadcast %364 : i1 to vector<1x256xi1>
    %366 = vector.broadcast %365 : vector<1x256xi1> to vector<1x256xi1>
    %367 = arith.xori %363, %366 : vector<1x256xi1>
    %368 = arith.andi %367, %361 : vector<1x256xi1>
    %369 = vector.broadcast %357 : i32 to vector<1x256xi32>
    %370 = arith.addi %359, %369 : vector<1x256xi32>
    %371 = arith.select %368, %370, %359 : vector<1x256xi1>, vector<1x256xi32>
    %372 = vector.extract_strided_slice %354 {offsets = [0, 0], sizes = [4, 256], strides = [1, 1]} : vector<4x290xf32> to vector<4x256xf32>
    %c-1_i32_140 = arith.constant -1 : i32
    %373 = vector.broadcast %c-1_i32_140 : i32 to vector<1x256xi32>
    %374 = arith.addi %371, %373 : vector<1x256xi32>
    %c0_i32_141 = arith.constant 0 : i32
    %375 = vector.broadcast %c0_i32_141 : i32 to vector<1x256xi32>
    %376 = arith.cmpi sge, %374, %375 : vector<1x256xi32>
    %c-1_i32_142 = arith.constant -1 : i32
    %377 = vector.broadcast %c-1_i32_142 : i32 to vector<1x256xi32>
    %378 = arith.addi %371, %377 : vector<1x256xi32>
    %c16_i32_143 = arith.constant 16 : i32
    %379 = vector.broadcast %c16_i32_143 : i32 to vector<1x256xi32>
    %380 = arith.cmpi slt, %378, %379 : vector<1x256xi32>
    %381 = arith.andi %376, %380 : vector<1x256xi1>
    %cst_144 = arith.constant 0.000000e+00 : f32
    %382 = vector.shape_cast %381 : vector<1x256xi1> to vector<1x256xi1>
    %383 = vector.broadcast %382 : vector<1x256xi1> to vector<4x256xi1>
    %384 = vector.broadcast %cst_144 : f32 to vector<4x256xf32>
    %385 = arith.select %383, %372, %384 : vector<4x256xi1>, vector<4x256xf32>
    %386 = vector.extract_strided_slice %354 {offsets = [0, 1], sizes = [4, 256], strides = [1, 1]} : vector<4x290xf32> to vector<4x256xf32>
    %387 = vector.extract_strided_slice %354 {offsets = [0, 2], sizes = [4, 256], strides = [1, 1]} : vector<4x290xf32> to vector<4x256xf32>
    %c1_i32_145 = arith.constant 1 : i32
    %388 = vector.broadcast %c1_i32_145 : i32 to vector<1x256xi32>
    %389 = arith.addi %371, %388 : vector<1x256xi32>
    %c0_i32_146 = arith.constant 0 : i32
    %390 = vector.broadcast %c0_i32_146 : i32 to vector<1x256xi32>
    %391 = arith.cmpi sge, %389, %390 : vector<1x256xi32>
    %c1_i32_147 = arith.constant 1 : i32
    %392 = vector.broadcast %c1_i32_147 : i32 to vector<1x256xi32>
    %393 = arith.addi %371, %392 : vector<1x256xi32>
    %c16_i32_148 = arith.constant 16 : i32
    %394 = vector.broadcast %c16_i32_148 : i32 to vector<1x256xi32>
    %395 = arith.cmpi slt, %393, %394 : vector<1x256xi32>
    %396 = arith.andi %391, %395 : vector<1x256xi1>
    %cst_149 = arith.constant 0.000000e+00 : f32
    %397 = vector.shape_cast %396 : vector<1x256xi1> to vector<1x256xi1>
    %398 = vector.broadcast %397 : vector<1x256xi1> to vector<4x256xi1>
    %399 = vector.broadcast %cst_149 : f32 to vector<4x256xf32>
    %400 = arith.select %398, %387, %399 : vector<4x256xi1>, vector<4x256xf32>
    %401 = vector.extract_strided_slice %354 {offsets = [0, 16], sizes = [4, 256], strides = [1, 1]} : vector<4x290xf32> to vector<4x256xf32>
    %c-1_i32_150 = arith.constant -1 : i32
    %402 = vector.broadcast %c-1_i32_150 : i32 to vector<1x256xi32>
    %403 = arith.addi %371, %402 : vector<1x256xi32>
    %c0_i32_151 = arith.constant 0 : i32
    %404 = vector.broadcast %c0_i32_151 : i32 to vector<1x256xi32>
    %405 = arith.cmpi sge, %403, %404 : vector<1x256xi32>
    %c-1_i32_152 = arith.constant -1 : i32
    %406 = vector.broadcast %c-1_i32_152 : i32 to vector<1x256xi32>
    %407 = arith.addi %371, %406 : vector<1x256xi32>
    %c16_i32_153 = arith.constant 16 : i32
    %408 = vector.broadcast %c16_i32_153 : i32 to vector<1x256xi32>
    %409 = arith.cmpi slt, %407, %408 : vector<1x256xi32>
    %410 = arith.andi %405, %409 : vector<1x256xi1>
    %cst_154 = arith.constant 0.000000e+00 : f32
    %411 = vector.shape_cast %410 : vector<1x256xi1> to vector<1x256xi1>
    %412 = vector.broadcast %411 : vector<1x256xi1> to vector<4x256xi1>
    %413 = vector.broadcast %cst_154 : f32 to vector<4x256xf32>
    %414 = arith.select %412, %401, %413 : vector<4x256xi1>, vector<4x256xf32>
    %415 = vector.extract_strided_slice %354 {offsets = [0, 17], sizes = [4, 256], strides = [1, 1]} : vector<4x290xf32> to vector<4x256xf32>
    %416 = vector.extract_strided_slice %354 {offsets = [0, 18], sizes = [4, 256], strides = [1, 1]} : vector<4x290xf32> to vector<4x256xf32>
    %c1_i32_155 = arith.constant 1 : i32
    %417 = vector.broadcast %c1_i32_155 : i32 to vector<1x256xi32>
    %418 = arith.addi %371, %417 : vector<1x256xi32>
    %c0_i32_156 = arith.constant 0 : i32
    %419 = vector.broadcast %c0_i32_156 : i32 to vector<1x256xi32>
    %420 = arith.cmpi sge, %418, %419 : vector<1x256xi32>
    %c1_i32_157 = arith.constant 1 : i32
    %421 = vector.broadcast %c1_i32_157 : i32 to vector<1x256xi32>
    %422 = arith.addi %371, %421 : vector<1x256xi32>
    %c16_i32_158 = arith.constant 16 : i32
    %423 = vector.broadcast %c16_i32_158 : i32 to vector<1x256xi32>
    %424 = arith.cmpi slt, %422, %423 : vector<1x256xi32>
    %425 = arith.andi %420, %424 : vector<1x256xi1>
    %cst_159 = arith.constant 0.000000e+00 : f32
    %426 = vector.shape_cast %425 : vector<1x256xi1> to vector<1x256xi1>
    %427 = vector.broadcast %426 : vector<1x256xi1> to vector<4x256xi1>
    %428 = vector.broadcast %cst_159 : f32 to vector<4x256xf32>
    %429 = arith.select %427, %416, %428 : vector<4x256xi1>, vector<4x256xf32>
    %430 = vector.extract_strided_slice %354 {offsets = [0, 32], sizes = [4, 256], strides = [1, 1]} : vector<4x290xf32> to vector<4x256xf32>
    %c-1_i32_160 = arith.constant -1 : i32
    %431 = vector.broadcast %c-1_i32_160 : i32 to vector<1x256xi32>
    %432 = arith.addi %371, %431 : vector<1x256xi32>
    %c0_i32_161 = arith.constant 0 : i32
    %433 = vector.broadcast %c0_i32_161 : i32 to vector<1x256xi32>
    %434 = arith.cmpi sge, %432, %433 : vector<1x256xi32>
    %c-1_i32_162 = arith.constant -1 : i32
    %435 = vector.broadcast %c-1_i32_162 : i32 to vector<1x256xi32>
    %436 = arith.addi %371, %435 : vector<1x256xi32>
    %c16_i32_163 = arith.constant 16 : i32
    %437 = vector.broadcast %c16_i32_163 : i32 to vector<1x256xi32>
    %438 = arith.cmpi slt, %436, %437 : vector<1x256xi32>
    %439 = arith.andi %434, %438 : vector<1x256xi1>
    %cst_164 = arith.constant 0.000000e+00 : f32
    %440 = vector.shape_cast %439 : vector<1x256xi1> to vector<1x256xi1>
    %441 = vector.broadcast %440 : vector<1x256xi1> to vector<4x256xi1>
    %442 = vector.broadcast %cst_164 : f32 to vector<4x256xf32>
    %443 = arith.select %441, %430, %442 : vector<4x256xi1>, vector<4x256xf32>
    %444 = vector.extract_strided_slice %354 {offsets = [0, 33], sizes = [4, 256], strides = [1, 1]} : vector<4x290xf32> to vector<4x256xf32>
    %445 = vector.extract_strided_slice %354 {offsets = [0, 34], sizes = [4, 256], strides = [1, 1]} : vector<4x290xf32> to vector<4x256xf32>
    %c1_i32_165 = arith.constant 1 : i32
    %446 = vector.broadcast %c1_i32_165 : i32 to vector<1x256xi32>
    %447 = arith.addi %371, %446 : vector<1x256xi32>
    %c0_i32_166 = arith.constant 0 : i32
    %448 = vector.broadcast %c0_i32_166 : i32 to vector<1x256xi32>
    %449 = arith.cmpi sge, %447, %448 : vector<1x256xi32>
    %c1_i32_167 = arith.constant 1 : i32
    %450 = vector.broadcast %c1_i32_167 : i32 to vector<1x256xi32>
    %451 = arith.addi %371, %450 : vector<1x256xi32>
    %c16_i32_168 = arith.constant 16 : i32
    %452 = vector.broadcast %c16_i32_168 : i32 to vector<1x256xi32>
    %453 = arith.cmpi slt, %451, %452 : vector<1x256xi32>
    %454 = arith.andi %449, %453 : vector<1x256xi1>
    %cst_169 = arith.constant 0.000000e+00 : f32
    %455 = vector.shape_cast %454 : vector<1x256xi1> to vector<1x256xi1>
    %456 = vector.broadcast %455 : vector<1x256xi1> to vector<4x256xi1>
    %457 = vector.broadcast %cst_169 : f32 to vector<4x256xf32>
    %458 = arith.select %456, %445, %457 : vector<4x256xi1>, vector<4x256xf32>
    %459 = tpu.concatenate %385, %386, %400, %414, %415, %429, %443, %444, %458 in 0 : vector<4x256xf32>, vector<4x256xf32>, vector<4x256xf32>, vector<4x256xf32>, vector<4x256xf32>, vector<4x256xf32>, vector<4x256xf32>, vector<4x256xf32>, vector<4x256xf32> -> vector<36x256xf32>
    %460 = arith.truncf %459 : vector<36x256xf32> to vector<36x256xbf16>
    %cst_170 = arith.constant dense<0.000000e+00> : vector<8x256xf32>
    %461 = tpu.matmul %350, %460, %cst_170 {dimension_numbers = #tpu.dot_dimension_numbers<[1], [0], [0], [1], [0, 0, 1, 1], [], []>} : vector<8x36xbf16>, vector<36x256xbf16>, vector<8x256xf32> -> vector<8x256xf32>
    %462 = arith.addf %349, %461 : vector<8x256xf32>
    %c0_171 = arith.constant 0 : index
    %c0_172 = arith.constant 0 : index
    %463 = vector.load %arg10[%c0_171, %c0_172] : memref<8x1xf32, #tpu.memory_space<vmem>>, vector<8x1xf32>
    %464 = vector.broadcast %463 : vector<8x1xf32> to vector<8x256xf32>
    %465 = arith.addf %462, %464 : vector<8x256xf32>
    %cst_173 = arith.constant 0.000000e+00 : f32
    %466 = vector.broadcast %cst_173 : f32 to vector<8x256xf32>
    %467 = arith.cmpf oge, %465, %466 : vector<8x256xf32>
    %cst_174 = arith.constant 0.00999999977 : f32
    %468 = vector.broadcast %cst_174 : f32 to vector<8x256xf32>
    %469 = arith.mulf %468, %465 : vector<8x256xf32>
    %470 = arith.select %467, %465, %469 : vector<8x256xi1>, vector<8x256xf32>
    %c0_175 = arith.constant 0 : index
    %c0_176 = arith.constant 0 : index
    %c0_177 = arith.constant 0 : index
    %471 = vector.load %arg11[%c0_175, %c0_176, %c0_177] : memref<1x8x256xf32, #tpu.memory_space<vmem>>, vector<1x8x256xf32>
    %472 = vector.shape_cast %471 : vector<1x8x256xf32> to vector<8x256xf32>
    %473 = vector.shape_cast %470 : vector<8x256xf32> to vector<1x8x256xf32>
    tpu.vector_store %arg11[%c0_175, %c0_176, %c0_177], %473 {strides = array<i32>} : memref<1x8x256xf32, #tpu.memory_space<vmem>>, vector<1x8x256xf32>,
    return
  }
  func.func @transform_0(%arg0: i32) -> (i32, i32, i32) {
    %c0_i32 = arith.constant 0 : i32
    %c0_i32_0 = arith.constant 0 : i32
    %c0_i32_1 = arith.constant 0 : i32
    return %arg0, %c0_i32, %c0_i32_0 : i32, i32, i32
  }
  func.func @transform_1(%arg0: i32) -> (i32, i32) {
    %c0_i32 = arith.constant 0 : i32
    %c0_i32_0 = arith.constant 0 : i32
    %c0_i32_1 = arith.constant 0 : i32
    return %c0_i32, %c0_i32_0 : i32, i32
  }
  func.func @transform_2(%arg0: i32) -> (i32, i32) {
    %c0_i32 = arith.constant 0 : i32
    %c0_i32_0 = arith.constant 0 : i32
    %c0_i32_1 = arith.constant 0 : i32
    return %c0_i32, %c0_i32_0 : i32, i32
  }
  func.func @transform_3(%arg0: i32) -> (i32, i32) {
    %c0_i32 = arith.constant 0 : i32
    %c0_i32_0 = arith.constant 0 : i32
    %c0_i32_1 = arith.constant 0 : i32
    return %c0_i32, %c0_i32_0 : i32, i32
  }
  func.func @transform_4(%arg0: i32) -> (i32, i32) {
    %c0_i32 = arith.constant 0 : i32
    %c0_i32_0 = arith.constant 0 : i32
    %c0_i32_1 = arith.constant 0 : i32
    return %c0_i32, %c0_i32_0 : i32, i32
  }
  func.func @transform_5(%arg0: i32) -> (i32, i32) {
    %c0_i32 = arith.constant 0 : i32
    %c0_i32_0 = arith.constant 0 : i32
    %c0_i32_1 = arith.constant 0 : i32
    return %c0_i32, %c0_i32_0 : i32, i32
  }
  func.func @transform_6(%arg0: i32) -> (i32, i32, i32) {
    %c0_i32 = arith.constant 0 : i32
    %c0_i32_0 = arith.constant 0 : i32
    %c0_i32_1 = arith.constant 0 : i32
    return %arg0, %c0_i32, %c0_i32_0 : i32, i32, i32
  }
  func.func @transform_7(%arg0: i32) -> (i32, i32) {
    %c0_i32 = arith.constant 0 : i32
    %c0_i32_0 = arith.constant 0 : i32
    %c0_i32_1 = arith.constant 0 : i32
    return %c0_i32, %c0_i32_0 : i32, i32
  }
  func.func @transform_8(%arg0: i32) -> (i32, i32) {
    %c0_i32 = arith.constant 0 : i32
    %c0_i32_0 = arith.constant 0 : i32
    %c0_i32_1 = arith.constant 0 : i32
    return %c0_i32, %c0_i32_0 : i32, i32
  }
  func.func @transform_9(%arg0: i32) -> (i32, i32) {
    %c0_i32 = arith.constant 0 : i32
    %c0_i32_0 = arith.constant 0 : i32
    %c0_i32_1 = arith.constant 0 : i32
    return %c0_i32, %c0_i32_0 : i32, i32
  }
  func.func @transform_10(%arg0: i32) -> (i32, i32, i32) {
    %c0_i32 = arith.constant 0 : i32
    %c0_i32_0 = arith.constant 0 : i32
    %c0_i32_1 = arith.constant 0 : i32
    return %arg0, %c0_i32, %c0_i32_0 : i32, i32, i32
  }
}

</mosaic_0001>

<llo_original>
// kernel: tpu_custom_call.1
$region0: #{tpu_custom_call.1}
  #allocation0 [shape = 'u32[]', space=smem, size = 0x4, offset = 0x4, fixed_abs, tag = 'smem constant byte address 0x4 - core index']
  #allocation1 [shape = 'u32[144,128]{1,0:T(1,128)}', space=vmem, size = 0x12000, scoped, tag = 'internal scratch']
  %s0 = inlined_call_operand.vmem [shape: f32[2,4,64], index: 0, kind: input, shape index: {}]
  %s1 = inlined_call_operand.hbm [shape: f32[64,256], index: 1, kind: input, shape index: {}]
  %s2 = inlined_call_operand.vmem [shape: bf16[8,36], index: 2, kind: input, shape index: {}]
  %s3 = inlined_call_operand.vmem [shape: f32[8,1], index: 3, kind: input, shape index: {}]
  %s4 = inlined_call_operand.vmem [shape: bf16[8,72], index: 4, kind: input, shape index: {}]
  %s5 = inlined_call_operand.vmem [shape: f32[8,1], index: 5, kind: input, shape index: {}]
  %s6 = inlined_call_operand.vmem [shape: f32[2,4,256], index: 6, kind: input, shape index: {}]
  %s7 = inlined_call_operand.vmem [shape: bf16[8,36], index: 7, kind: input, shape index: {}]
  %s8 = inlined_call_operand.vmem [shape: bf16[8,72], index: 8, kind: input, shape index: {}]
  %s9 = inlined_call_operand.vmem [shape: f32[8,1], index: 9, kind: input, shape index: {}]
  %s10 = inlined_call_operand.hbm [shape: f32[2,8,256], index: 10, kind: output, shape index: {}]
  %s11 = sld [smem:[#allocation0]]
  $region77: #{tpu_custom_call.1} parent=0
    _
  %s13 = ssub.s32 1, %s11
  %s14 = scalar_select 0, %s13, %s11
  $region1: #{tpu_custom_call.1} parent=0
    #allocation2 [shape = 'u8[65536]{0}', space=vmem, size = 0x10000, scoped, tag = 'input window, operand 1, single buffered']
    #allocation3 [shape = 's32[2]{0}', space=sflag, size = 0x8, scoped, tag = 'scoped memory for tpu_custom_call.1']
    #allocation4 [shape = 's32[2]{0}', space=sflag, size = 0x8, scoped, tag = 'scoped memory for tpu_custom_call.1']
    #allocation5 [shape = 'u8[16384]{0}', space=vmem, size = 0x4000, scoped, tag = 'output window, operand 0']
    %15 = vsyncpa [#allocation3], 0
    %16 = vsyncpa [#allocation4], 0
    %s17 = scalar_lea.sflag [#allocation4], 1
    %18 = vsyncpa %s17, 0
    loop: start=0, step=1, limit=4
    $region2: #{tpu_custom_call.1} parent=1 // loop_pre_header
      _
    $region3: #{tpu_custom_call.1} parent=1 // loop_header
      %s20 = sphi 0, %s24
      %p21 = scmp.ge.s32.totalorder %s20, 4
      %s30 = sphi 0, %s32
      %s33 = sphi 0, %s30
      %s34 = sphi 0, %s33
      %s50 = sphi 0, %s34
      %s54 = sphi 0, %s54
      %s56 = sphi 0, %s54
      %s57 = sphi 0, %s56
      %s71 = sphi 0, %s57
      %s75 = sphi 0, %s75
      %s77 = sphi 0, %s75
      %s78 = sphi 0, %s77
      %s92 = sphi 0, %s78
      %s96 = sphi 0, %s96
      %s98 = sphi 0, %s96
      %s99 = sphi 0, %s98
      %s113 = sphi 0, %s99
      %s117 = sphi 0, %s117
      %s119 = sphi 0, %s117
      %s120 = sphi 0, %s119
      %s134 = sphi 0, %s120
      %s138 = sphi 0, %s138
      %s140 = sphi 0, %s138
      %s141 = sphi 0, %s140
      %s155 = sphi 0, %s141
      %s161 = sphi 0, %s163
      %s164 = sphi 0, %s161
      %s165 = sphi 0, %s164
      %s181 = sphi 0, %s165
      %s185 = sphi 0, %s185
      %s187 = sphi 0, %s185
      %s188 = sphi 0, %s187
      %s202 = sphi 0, %s188
      %s206 = sphi 0, %s206
      %s208 = sphi 0, %s206
      %s209 = sphi 0, %s208
      %s223 = sphi 0, %s209
      %s227 = sphi 0, %s227
      %s229 = sphi 0, %s227
      %s230 = sphi 0, %s229
      %s244 = sphi 0, %s230
      %s250 = sphi 0, %s252
      %s253 = sphi 0, %s250
      %s254 = sphi 0, %s253
      %s270 = sphi 0, %s254
    $region4: #{tpu_custom_call.1} parent=1 // loop_header_branch
      %23 = sbr.rel (%p21) target = $region8
    $region5: #{tpu_custom_call.1} parent=1 // loop_body
      %s25 = ssub.s32 %s20, 1
      %s26 = ssub.s32 %s20, 2
      %s27 = sadd.s32 %s20, 1
      %s28 = ssub.s32 %s20, %s27
      %p29 = scmp.eq.s32.totalorder %s28, 0
      %s31 = sadd.s32 %s30, 1
      %s32 = scalar_select %p29, %s30, %s31
      %p35 = pneg %p29
      %p36 = scmp.eq.s32.totalorder %s20, 1
      %p37 = por %p35, %p36
      %p38 = scmp.ne.s32.totalorder %s30, %s33
      %p39 = scmp.eq.s32.totalorder %s20, 0
      %p40 = por %p38, %p39
      %p41 = scmp.ne.s32.totalorder %s30, %s33
      %p42 = scmp.eq.s32.totalorder %s25, 1
      %p43 = por %p41, %p42
      %p44 = scmp.ne.s32.totalorder %s33, %s34
      %p45 = scmp.eq.s32.totalorder %s25, 0
      %p46 = por %p44, %p45
      %p47 = scmp.ne.s32.totalorder %s33, %s34
      %p48 = scmp.eq.s32.totalorder %s26, 1
      %p49 = por %p47, %p48
      %p51 = scmp.ne.s32.totalorder %s34, %s50
      %p52 = scmp.eq.s32.totalorder %s26, 0
      %p53 = por %p51, %p52
      %s55 = sadd.s32 %s54, 1
      %p58 = scmp.eq.s32.totalorder %s20, 1
      %p59 = scmp.ne.s32.totalorder %s54, %s56
      %p60 = scmp.eq.s32.totalorder %s20, 0
      %p61 = por %p59, %p60
      %p62 = scmp.ne.s32.totalorder %s54, %s56
      %p63 = scmp.eq.s32.totalorder %s25, 1
      %p64 = por %p62, %p63
      %p65 = scmp.ne.s32.totalorder %s56, %s57
      %p66 = scmp.eq.s32.totalorder %s25, 0
      %p67 = por %p65, %p66
      %p68 = scmp.ne.s32.totalorder %s56, %s57
      %p69 = scmp.eq.s32.totalorder %s26, 1
      %p70 = por %p68, %p69
      %p72 = scmp.ne.s32.totalorder %s57, %s71
      %p73 = scmp.eq.s32.totalorder %s26, 0
      %p74 = por %p72, %p73
      %s76 = sadd.s32 %s75, 1
      %p79 = scmp.eq.s32.totalorder %s20, 1
      %p80 = scmp.ne.s32.totalorder %s75, %s77
      %p81 = scmp.eq.s32.totalorder %s20, 0
      %p82 = por %p80, %p81
      %p83 = scmp.ne.s32.totalorder %s75, %s77
      %p84 = scmp.eq.s32.totalorder %s25, 1
      %p85 = por %p83, %p84
      %p86 = scmp.ne.s32.totalorder %s77, %s78
      %p87 = scmp.eq.s32.totalorder %s25, 0
      %p88 = por %p86, %p87
      %p89 = scmp.ne.s32.totalorder %s77, %s78
      %p90 = scmp.eq.s32.totalorder %s26, 1
      %p91 = por %p89, %p90
      %p93 = scmp.ne.s32.totalorder %s78, %s92
      %p94 = scmp.eq.s32.totalorder %s26, 0
      %p95 = por %p93, %p94
      %s97 = sadd.s32 %s96, 1
      %p100 = scmp.eq.s32.totalorder %s20, 1
      %p101 = scmp.ne.s32.totalorder %s96, %s98
      %p102 = scmp.eq.s32.totalorder %s20, 0
      %p103 = por %p101, %p102
      %p104 = scmp.ne.s32.totalorder %s96, %s98
      %p105 = scmp.eq.s32.totalorder %s25, 1
      %p106 = por %p104, %p105
      %p107 = scmp.ne.s32.totalorder %s98, %s99
      %p108 = scmp.eq.s32.totalorder %s25, 0
      %p109 = por %p107, %p108
      %p110 = scmp.ne.s32.totalorder %s98, %s99
      %p111 = scmp.eq.s32.totalorder %s26, 1
      %p112 = por %p110, %p111
      %p114 = scmp.ne.s32.totalorder %s99, %s113
      %p115 = scmp.eq.s32.totalorder %s26, 0
      %p116 = por %p114, %p115
      %s118 = sadd.s32 %s117, 1
      %p121 = scmp.eq.s32.totalorder %s20, 1
      %p122 = scmp.ne.s32.totalorder %s117, %s119
      %p123 = scmp.eq.s32.totalorder %s20, 0
      %p124 = por %p122, %p123
      %p125 = scmp.ne.s32.totalorder %s117, %s119
      %p126 = scmp.eq.s32.totalorder %s25, 1
      %p127 = por %p125, %p126
      %p128 = scmp.ne.s32.totalorder %s119, %s120
      %p129 = scmp.eq.s32.totalorder %s25, 0
      %p130 = por %p128, %p129
      %p131 = scmp.ne.s32.totalorder %s119, %s120
      %p132 = scmp.eq.s32.totalorder %s26, 1
      %p133 = por %p131, %p132
      %p135 = scmp.ne.s32.totalorder %s120, %s134
      %p136 = scmp.eq.s32.totalorder %s26, 0
      %p137 = por %p135, %p136
      %s139 = sadd.s32 %s138, 1
      %p142 = scmp.eq.s32.totalorder %s20, 1
      %p143 = scmp.ne.s32.totalorder %s138, %s140
      %p144 = scmp.eq.s32.totalorder %s20, 0
      %p145 = por %p143, %p144
      %p146 = scmp.ne.s32.totalorder %s138, %s140
      %p147 = scmp.eq.s32.totalorder %s25, 1
      %p148 = por %p146, %p147
      %p149 = scmp.ne.s32.totalorder %s140, %s141
      %p150 = scmp.eq.s32.totalorder %s25, 0
      %p151 = por %p149, %p150
      %p152 = scmp.ne.s32.totalorder %s140, %s141
      %p153 = scmp.eq.s32.totalorder %s26, 1
      %p154 = por %p152, %p153
      %p156 = scmp.ne.s32.totalorder %s141, %s155
      %p157 = scmp.eq.s32.totalorder %s26, 0
      %p158 = por %p156, %p157
      %s159 = ssub.s32 %s20, %s27
      %p160 = scmp.eq.s32.totalorder %s159, 0
      %s162 = sadd.s32 %s161, 1
      %s163 = scalar_select %p160, %s161, %s162
      %p166 = pneg %p160
      %p167 = scmp.eq.s32.totalorder %s20, 1
      %p168 = por %p166, %p167
      %p169 = scmp.ne.s32.totalorder %s161, %s164
      %p170 = scmp.eq.s32.totalorder %s20, 0
      %p171 = por %p169, %p170
      %p172 = scmp.ne.s32.totalorder %s161, %s164
      %p173 = scmp.eq.s32.totalorder %s25, 1
      %p174 = por %p172, %p173
      %p175 = scmp.ne.s32.totalorder %s164, %s165
      %p176 = scmp.eq.s32.totalorder %s25, 0
      %p177 = por %p175, %p176
      %p178 = scmp.ne.s32.totalorder %s164, %s165
      %p179 = scmp.eq.s32.totalorder %s26, 1
      %p180 = por %p178, %p179
      %p182 = scmp.ne.s32.totalorder %s165, %s181
      %p183 = scmp.eq.s32.totalorder %s26, 0
      %p184 = por %p182, %p183
      %s186 = sadd.s32 %s185, 1
      %p189 = scmp.eq.s32.totalorder %s20, 1
      %p190 = scmp.ne.s32.totalorder %s185, %s187
      %p191 = scmp.eq.s32.totalorder %s20, 0
      %p192 = por %p190, %p191
      %p193 = scmp.ne.s32.totalorder %s185, %s187
      %p194 = scmp.eq.s32.totalorder %s25, 1
      %p195 = por %p193, %p194
      %p196 = scmp.ne.s32.totalorder %s187, %s188
      %p197 = scmp.eq.s32.totalorder %s25, 0
      %p198 = por %p196, %p197
      %p199 = scmp.ne.s32.totalorder %s187, %s188
      %p200 = scmp.eq.s32.totalorder %s26, 1
      %p201 = por %p199, %p200
      %p203 = scmp.ne.s32.totalorder %s188, %s202
      %p204 = scmp.eq.s32.totalorder %s26, 0
      %p205 = por %p203, %p204
      %s207 = sadd.s32 %s206, 1
      %p210 = scmp.eq.s32.totalorder %s20, 1
      %p211 = scmp.ne.s32.totalorder %s206, %s208
      %p212 = scmp.eq.s32.totalorder %s20, 0
      %p213 = por %p211, %p212
      %p214 = scmp.ne.s32.totalorder %s206, %s208
      %p215 = scmp.eq.s32.totalorder %s25, 1
      %p216 = por %p214, %p215
      %p217 = scmp.ne.s32.totalorder %s208, %s209
      %p218 = scmp.eq.s32.totalorder %s25, 0
      %p219 = por %p217, %p218
      %p220 = scmp.ne.s32.totalorder %s208, %s209
      %p221 = scmp.eq.s32.totalorder %s26, 1
      %p222 = por %p220, %p221
      %p224 = scmp.ne.s32.totalorder %s209, %s223
      %p225 = scmp.eq.s32.totalorder %s26, 0
      %p226 = por %p224, %p225
      %s228 = sadd.s32 %s227, 1
      %p231 = scmp.eq.s32.totalorder %s20, 1
      %p232 = scmp.ne.s32.totalorder %s227, %s229
      %p233 = scmp.eq.s32.totalorder %s20, 0
      %p234 = por %p232, %p233
      %p235 = scmp.ne.s32.totalorder %s227, %s229
      %p236 = scmp.eq.s32.totalorder %s25, 1
      %p237 = por %p235, %p236
      %p238 = scmp.ne.s32.totalorder %s229, %s230
      %p239 = scmp.eq.s32.totalorder %s25, 0
      %p240 = por %p238, %p239
      %p241 = scmp.ne.s32.totalorder %s229, %s230
      %p242 = scmp.eq.s32.totalorder %s26, 1
      %p243 = por %p241, %p242
      %p245 = scmp.ne.s32.totalorder %s230, %s244
      %p246 = scmp.eq.s32.totalorder %s26, 0
      %p247 = por %p245, %p246
      %s248 = ssub.s32 %s20, %s27
      %p249 = scmp.eq.s32.totalorder %s248, 0
      %s251 = sadd.s32 %s250, 1
      %s252 = scalar_select %p249, %s250, %s251
      %p255 = pneg %p249
      %p256 = scmp.eq.s32.totalorder %s20, 1
      %p257 = por %p255, %p256
      %p258 = scmp.ne.s32.totalorder %s250, %s253
      %p259 = scmp.eq.s32.totalorder %s20, 0
      %p260 = por %p258, %p259
      %p261 = scmp.ne.s32.totalorder %s250, %s253
      %p262 = scmp.eq.s32.totalorder %s25, 1
      %p263 = por %p261, %p262
      %p264 = scmp.ne.s32.totalorder %s253, %s254
      %p265 = scmp.eq.s32.totalorder %s25, 0
      %p266 = por %p264, %p265
      %p267 = scmp.ne.s32.totalorder %s253, %s254
      %p268 = scmp.eq.s32.totalorder %s26, 1
      %p269 = por %p267, %p268
      %p271 = scmp.ne.s32.totalorder %s254, %s270
      %p272 = scmp.eq.s32.totalorder %s26, 0
      %p273 = por %p271, %p272
      %p274 = scmp.le.s32.totalorder 1, %s20
      %p275 = scmp.lt.s32.totalorder %s20, 3
      %p276 = pnand %p274, %p275
      %p277 = pneg %p276
      // Predicated region
      $region9: #{tpu_custom_call.1} parent=5 // pred_check
        _
      $region10: #{tpu_custom_call.1} parent=5 // pred_check_branch
        %279 = sbr.rel (%p276) target = $region12
      $region11: #{tpu_custom_call.1} parent=5 // pred_region
        %s280 = ssub.s32 %s20, 1
        // Predicated region
        $region13: #{tpu_custom_call.1} parent=11 // pred_check
          %p281 = pneg %p67
        $region14: #{tpu_custom_call.1} parent=11 // pred_check_branch
          %283 = sbr.rel (%p281) target = $region16
        $region15: #{tpu_custom_call.1} parent=11 // pred_region
          %s285 = ssub.s32 2048, 2048
          %286 = vsyncadd [#allocation3], %s285
          %s287 = sshll.u32 [#allocation2], 4
          %s288 = int_to_ptr.vmem [resolvable:$true] %s287
          %293 = dma.hbm_to_vmem [thread:$0]  %s1, 2048, %s288, [#allocation3], 256, 256, 16
        $region16: #{tpu_custom_call.1} parent=11 // pred_fallthru
          _
        // Predicated region
        $region17: #{tpu_custom_call.1} parent=11 // pred_check
          %p294 = pneg %p88
        $region18: #{tpu_custom_call.1} parent=11 // pred_check_branch
          %296 = sbr.rel (%p294) target = $region20
        $region19: #{tpu_custom_call.1} parent=11 // pred_region
          _
        $region20: #{tpu_custom_call.1} parent=11 // pred_fallthru
          _
        // Predicated region
        $region21: #{tpu_custom_call.1} parent=11 // pred_check
          %p297 = pneg %p109
        $region22: #{tpu_custom_call.1} parent=11 // pred_check_branch
          %299 = sbr.rel (%p297) target = $region24
        $region23: #{tpu_custom_call.1} parent=11 // pred_region
          _
        $region24: #{tpu_custom_call.1} parent=11 // pred_fallthru
          _
        // Predicated region
        $region25: #{tpu_custom_call.1} parent=11 // pred_check
          %p300 = pneg %p130
        $region26: #{tpu_custom_call.1} parent=11 // pred_check_branch
          %302 = sbr.rel (%p300) target = $region28
        $region27: #{tpu_custom_call.1} parent=11 // pred_region
          _
        $region28: #{tpu_custom_call.1} parent=11 // pred_fallthru
          _
        // Predicated region
        $region29: #{tpu_custom_call.1} parent=11 // pred_check
          %p303 = pneg %p151
        $region30: #{tpu_custom_call.1} parent=11 // pred_check_branch
          %305 = sbr.rel (%p303) target = $region32
        $region31: #{tpu_custom_call.1} parent=11 // pred_region
          _
        $region32: #{tpu_custom_call.1} parent=11 // pred_fallthru
          _
        // Predicated region
        $region33: #{tpu_custom_call.1} parent=11 // pred_check
          %p306 = pneg %p198
        $region34: #{tpu_custom_call.1} parent=11 // pred_check_branch
          %308 = sbr.rel (%p306) target = $region36
        $region35: #{tpu_custom_call.1} parent=11 // pred_region
          _
        $region36: #{tpu_custom_call.1} parent=11 // pred_fallthru
          _
        // Predicated region
        $region37: #{tpu_custom_call.1} parent=11 // pred_check
          %p309 = pneg %p219
        $region38: #{tpu_custom_call.1} parent=11 // pred_check_branch
          %311 = sbr.rel (%p309) target = $region40
        $region39: #{tpu_custom_call.1} parent=11 // pred_region
          _
        $region40: #{tpu_custom_call.1} parent=11 // pred_fallthru
          _
        // Predicated region
        $region41: #{tpu_custom_call.1} parent=11 // pred_check
          %p312 = pneg %p240
        $region42: #{tpu_custom_call.1} parent=11 // pred_check_branch
          %314 = sbr.rel (%p312) target = $region44
        $region43: #{tpu_custom_call.1} parent=11 // pred_region
          _
        $region44: #{tpu_custom_call.1} parent=11 // pred_fallthru
          _
      $region12: #{tpu_custom_call.1} parent=5 // pred_fallthru
        _
      %p315 = scmp.lt.s32.totalorder %s20, 2
      // Predicated region
      $region45: #{tpu_custom_call.1} parent=5 // pred_check
        %p316 = pneg %p315
      $region46: #{tpu_custom_call.1} parent=5 // pred_check_branch
        %318 = sbr.rel (%p316) target = $region48
      $region47: #{tpu_custom_call.1} parent=5 // pred_region
        // Predicated region
        $region49: #{tpu_custom_call.1} parent=47 // pred_check
          %p319 = pneg %p40
        $region50: #{tpu_custom_call.1} parent=47 // pred_check_branch
          %321 = sbr.rel (%p319) target = $region52
        $region51: #{tpu_custom_call.1} parent=47 // pred_region
          %p322 = scmp.lt.s32.totalorder %s20, 1
          %s323 = scalar_select %p322, %s20, 1
          %s324 = smul.addr %s323, 4
          %s325 = scalar_lea.vmem %s0, %s324
        $region52: #{tpu_custom_call.1} parent=47 // pred_fallthru
          _
        // Predicated region
        $region53: #{tpu_custom_call.1} parent=47 // pred_check
          %p326 = pneg %p171
        $region54: #{tpu_custom_call.1} parent=47 // pred_check_branch
          %328 = sbr.rel (%p326) target = $region56
        $region55: #{tpu_custom_call.1} parent=47 // pred_region
          %p329 = scmp.lt.s32.totalorder %s20, 1
          %s330 = scalar_select %p329, %s20, 1
          %s331 = smul.addr %s330, 2
          %s332 = smul.addr %s331, 4
          %s333 = scalar_lea.vmem %s6, %s332
        $region56: #{tpu_custom_call.1} parent=47 // pred_fallthru
          _
      $region48: #{tpu_custom_call.1} parent=5 // pred_fallthru
        _
      %p334 = scmp.le.s32.totalorder 1, %s20
      %p335 = scmp.lt.s32.totalorder %s20, 3
      %p336 = pnand %p334, %p335
      %p337 = pneg %p336
      // Predicated region
      $region57: #{tpu_custom_call.1} parent=5 // pred_check
        _
      $region58: #{tpu_custom_call.1} parent=5 // pred_check_branch
        %339 = sbr.rel (%p336) target = $region60
      $region59: #{tpu_custom_call.1} parent=5 // pred_region
        %s340 = ssub.s32 %s20, 1
        // Predicated region
        $region61: #{tpu_custom_call.1} parent=59 // pred_check
          %p341 = pneg %p67
        $region62: #{tpu_custom_call.1} parent=59 // pred_check_branch
          %343 = sbr.rel (%p341) target = $region64
        $region63: #{tpu_custom_call.1} parent=59 // pred_region
          %344 = dma.done [#allocation3], 2048
        $region64: #{tpu_custom_call.1} parent=59 // pred_fallthru
          _
        %p345 = scmp.lt.s32.totalorder %s25, 1
        %s346 = scalar_select %p345, %s25, 1
        %s347 = smul.addr %s346, 4
        %s348 = scalar_lea.vmem %s0, %s347
        %p349 = pneg %p46
        %p350 = pneg %p43
        %p351 = pneg %p67
        %p352 = pneg %p64
        %p353 = pneg %p88
        %p354 = pneg %p85
        %p355 = pneg %p109
        %p356 = pneg %p106
        %p357 = pneg %p130
        %p358 = pneg %p127
        %p359 = pneg %p151
        %p360 = pneg %p148
        %p361 = scmp.lt.s32.totalorder %s25, 1
        %s362 = scalar_select %p361, %s25, 1
        %s363 = smul.addr %s362, 2
        %s364 = smul.addr %s363, 4
        %s365 = scalar_lea.vmem %s6, %s364
        %p366 = pneg %p177
        %p367 = pneg %p174
        %p368 = pneg %p198
        %p369 = pneg %p195
        %p370 = pneg %p219
        %p371 = pneg %p216
        %p372 = pneg %p240
        %p373 = pneg %p237
        %p374 = pneg %p266
        %p375 = pneg %p263
        %s376 = sand.u32 %s253, 1
        %s377 = scalar_lea.sflag [#allocation4], %s376
        %s378 = sand.u32 %s253, 1
        %s379 = smul.addr %s378, 16
        %s380 = scalar_lea.vmem [#allocation5], %s379
        %p381 = scmp.lt.s32.totalorder %s25, 1
        %s382 = scalar_select %p381, %s25, 1
        %s383 = smul.addr %s382, 4
        %s384 = scalar_lea.vmem %s0, %s383
        %p385 = scmp.lt.s32.totalorder %s25, 1
        %s386 = scalar_select %p385, %s25, 1
        %s387 = smul.addr %s386, 2
        %s388 = smul.addr %s387, 4
        %s389 = scalar_lea.vmem %s6, %s388
        %v391 = vld [vmem:[%s384] sm:$0xf]
        %v392 = vld [vmem:[#allocation2] sm:$0xff]
        %v393 = vld [vmem:[#allocation2 + $0x8] sm:$0xff]
        %v394 = vld [vmem:[#allocation2 + $0x10] sm:$0xff]
        %v395 = vld [vmem:[#allocation2 + $0x18] sm:$0xff]
        %v396 = vld [vmem:[#allocation2 + $0x20] sm:$0xff]
        %v397 = vld [vmem:[#allocation2 + $0x28] sm:$0xff]
        %v398 = vld [vmem:[#allocation2 + $0x30] sm:$0xff]
        %v399 = vld [vmem:[#allocation2 + $0x38] sm:$0xff]
        %v400 = vld [vmem:[#allocation2 + $0x40] sm:$0xff]
        %v401 = vld [vmem:[#allocation2 + $0x48] sm:$0xff]
        %v402 = vld [vmem:[#allocation2 + $0x50] sm:$0xff]
        %v403 = vld [vmem:[#allocation2 + $0x58] sm:$0xff]
        %v404 = vld [vmem:[#allocation2 + $0x60] sm:$0xff]
        %v405 = vld [vmem:[#allocation2 + $0x68] sm:$0xff]
        %v406 = vld [vmem:[#allocation2 + $0x70] sm:$0xff]
        %v407 = vld [vmem:[#allocation2 + $0x78] sm:$0xff]
        %vm408 = vcmask 523264
        %v410 = vsel %vm408, %v391, 0
        %412 = vmatprep.subr.mxu0 0.0
        %413 = vmatpush1.msra.mxu0 0.0
        %414 = vmatprep.subr.mxu0 0.0
        %415 = vmatpush1.msra.mxu0 0.0
        %416 = vmatprep.subr.mxu0 0.0
        %417 = vmatpush1.msra.mxu0 0.0
        %418 = vmatprep.subr.mxu0 0.0
        %419 = vmatpush1.msra.mxu0 0.0
        %420 = vmatprep.subr.mxu0 0.0
        %421 = vmatpush1.msra.mxu0 0.0
        %422 = vmatprep.subr.mxu0 0.0
        %423 = vmatpush1.msra.mxu0 0.0
        %424 = vmatprep.subr.mxu0 0.0
        %425 = vmatpush1.msra.mxu0 0.0
        %426 = vmatprep.subr.mxu0 0.0
        %427 = vmatpush1.msra.mxu0 0.0
        %428 = vmatprep.subr.mxu0 %v407
        %429 = vmatpush1.msra.mxu0 %v406
        %430 = vmatprep.subr.mxu0 %v405
        %431 = vmatpush1.msra.mxu0 %v404
        %432 = vmatprep.subr.mxu0 %v403
        %433 = vmatpush1.msra.mxu0 %v402
        %434 = vmatprep.subr.mxu0 %v401
        %435 = vmatpush1.msra.mxu0 %v400
        %436 = vmatprep.subr.mxu0 %v399
        %437 = vmatpush1.msra.mxu0 %v398
        %438 = vmatprep.subr.mxu0 %v397
        %439 = vmatpush1.msra.mxu0 %v396
        %440 = vmatprep.subr.mxu0 %v395
        %441 = vmatpush1.msra.mxu0 %v394
        %442 = vmatprep.subr.mxu0 %v393
        %443 = vmatpush1.msra.mxu0 %v392
        %444 = vmatprep.subr.mxu0 0.0
        %445 = vmatpush2.msra.mxu0 0.0
        %446 = vmatprep.subr.mxu0 0.0
        %447 = vmatpush2.msra.mxu0 0.0
        %448 = vmatprep.subr.mxu0 0.0
        %449 = vmatpush2.msra.mxu0 0.0
        %450 = vmatprep.subr.mxu0 0.0
        %451 = vmatpush2.msra.mxu0 0.0
        %452 = vmatprep.subr.mxu0 0.0
        %453 = vmatpush2.msra.mxu0 0.0
        %454 = vmatprep.subr.mxu0 0.0
        %455 = vmatpush2.msra.mxu0 0.0
        %456 = vmatprep.subr.mxu0 0.0
        %457 = vmatpush2.msra.mxu0 0.0
        %458 = vmatprep.subr.mxu0 0.0
        %459 = vmatpush2.msra.mxu0 0.0
        %460 = vmatprep.subr.mxu0 0.0
        %461 = vmatpush2.msra.mxu0 0.0
        %462 = vmatprep.subr.mxu0 0.0
        %463 = vmatpush2.msra.mxu0 0.0
        %464 = vmatprep.subr.mxu0 0.0
        %465 = vmatpush2.msra.mxu0 0.0
        %466 = vmatprep.subr.mxu0 0.0
        %467 = vmatpush2.msra.mxu0 0.0
        %468 = vmatprep.subr.mxu0 0.0
        %469 = vmatpush2.msra.mxu0 0.0
        %470 = vmatprep.subr.mxu0 0.0
        %471 = vmatpush2.msra.mxu0 0.0
        %472 = vmatprep.subr.mxu0 0.0
        %473 = vmatpush2.msra.mxu0 0.0
        %474 = vmatprep.subr.mxu0 0.0
        %475 = vmatpush2.msra.mxu0 0.0
        %476 = vmatprep.mubr.f32.mxu0 0.0
        %477 = vmatmul.mubr.f32.gmra.mxu0 %v410
        %v478 = vpop.f32.mrf.mxu0
        %v479 = vadd.f32 0.0, %v478
        %v480 = vpop.f32.mrf.mxu0
        %v481 = vadd.f32 0.0, %v480
        %482 = vdwg.mxu0
        %v483 = vld [vmem:[%s2] sm:$0xf]
        %v484 = vld [vmem:[%s3] sm:$0xff]
        %487 = vrot.lane.b32.xlu0 %v479, 17
        %v488 = vpop.permute.xlu0 %487
        %489 = vrot.lane.b32.xlu0 %v481, 17
        %v490 = vpop.permute.xlu0 %489
        %vm491 = vcmask 138240
        %v492 = vsel %vm491, %v488, %v490
        %v496 = vsel %vm491, 0.0, %v488
        %v497 = vsel %vm491, %v490, 0.0
        %v498 = vlaneseq
        %v499 = vand.u32 %v498, 127
        %v500 = vadd.s32 %v499, 128
        %vm501 = vcmp.lt.s32.totalorder %v499, 0
        %v502 = vsub.s32 0, %v499
        %v503 = vsel %vm501, %v502, %v499
        %v504 = vshrl.u32 %v503, 4
        %v505 = vand.u32 %v503, 15
        %v506 = vsub.s32 0, %v505
        %v507 = vsel %vm501, %v506, %v505
        %vm508 = vcmp.lt.s32.totalorder %v500, 0
        %v509 = vsub.s32 0, %v500
        %v510 = vsel %vm508, %v509, %v500
        %v511 = vshrl.u32 %v510, 4
        %v512 = vand.u32 %v510, 15
        %v513 = vsub.s32 0, %v512
        %v514 = vsel %vm508, %v513, %v512
        %vm515 = vcmp.ne.s32.totalorder %v507, 0
        %vm516 = vcmp.ne.s32.totalorder %v514, 0
        %vm517 = vcmp.lt.s32.totalorder %v507, 0
        %vm518 = vcmp.lt.s32.totalorder %v514, 0
        %vm519 = vmand %vm517, %vm515
        %vm520 = vmand %vm518, %vm516
        %v521 = vadd.s32 %v507, 16
        %v522 = vadd.s32 %v514, 16
        %v523 = vsel %vm519, %v521, %v507
        %v524 = vsel %vm520, %v522, %v514
        %v525 = vadd.s32 %v523, 4294967295
        %v526 = vadd.s32 %v524, 4294967295
        %vm527 = vcmp.ge.s32.totalorder %v525, 0
        %vm528 = vcmp.ge.s32.totalorder %v526, 0
        %vm529 = vcmp.lt.s32.totalorder %v525, 16
        %vm530 = vcmp.lt.s32.totalorder %v526, 16
        %vm531 = vmand %vm527, %vm529
        %vm532 = vmand %vm528, %vm530
        %v533 = vsel %vm531, 1, 0
        %v534 = vsel %vm532, 1, 0
        %vm535 = vcmp.eq.s32.totalorder %v533, 1
        %vm536 = vcmp.eq.s32.totalorder %v534, 1
        %v537 = vsel %vm535, %v496, 0.0
        %v538 = vsel %vm536, %v492, 0.0
        %v539 = vadd.s32 %v523, 1
        %v540 = vadd.s32 %v524, 1
        %vm541 = vcmp.ge.s32.totalorder %v539, 0
        %vm542 = vcmp.ge.s32.totalorder %v540, 0
        %vm543 = vcmp.lt.s32.totalorder %v539, 16
        %vm544 = vcmp.lt.s32.totalorder %v540, 16
        %vm545 = vmand %vm541, %vm543
        %vm546 = vmand %vm542, %vm544
        %v547 = vsel %vm545, 1, 0
        %v548 = vsel %vm546, 1, 0
        %vm549 = vcmp.eq.s32.totalorder %v547, 1
        %vm550 = vcmp.eq.s32.totalorder %v548, 1
        %553 = vrot.lane.b32.xlu0 %v496, 126
        %v554 = vpop.permute.xlu0 %553
        %555 = vrot.lane.b32.xlu0 %v492, 126
        %v556 = vpop.permute.xlu0 %555
        %557 = vrot.lane.b32.xlu0 %v497, 126
        %v558 = vpop.permute.xlu0 %557
        %vm559 = vcmask 1031168
        %v560 = vsel %vm559, %v554, %v556
        %v561 = vsel %vm559, %v556, %v558
        %v564 = vsel %vm549, %v560, 0.0
        %v565 = vsel %vm550, %v561, 0.0
        %566 = vrot.lane.b32.xlu0 %v496, 112
        %v567 = vpop.permute.xlu0 %566
        %568 = vrot.lane.b32.xlu0 %v492, 112
        %v569 = vpop.permute.xlu0 %568
        %570 = vrot.lane.b32.xlu0 %v497, 112
        %v571 = vpop.permute.xlu0 %570
        %vm572 = vcmask 916480
        %v573 = vsel %vm572, %v567, %v569
        %v574 = vsel %vm572, %v569, %v571
        %v577 = vsel %vm535, %v573, 0.0
        %v578 = vsel %vm536, %v574, 0.0
        %579 = vrot.lane.b32.xlu0 %v496, 110
        %v580 = vpop.permute.xlu0 %579
        %581 = vrot.lane.b32.xlu0 %v492, 110
        %v582 = vpop.permute.xlu0 %581
        %583 = vrot.lane.b32.xlu0 %v497, 110
        %v584 = vpop.permute.xlu0 %583
        %vm585 = vcmask 900096
        %v586 = vsel %vm585, %v580, %v582
        %v587 = vsel %vm585, %v582, %v584
        %v590 = vsel %vm549, %v586, 0.0
        %v591 = vsel %vm550, %v587, 0.0
        %592 = vrot.lane.b32.xlu0 %v496, 96
        %v593 = vpop.permute.xlu0 %592
        %594 = vrot.lane.b32.xlu0 %v492, 96
        %v595 = vpop.permute.xlu0 %594
        %596 = vrot.lane.b32.xlu0 %v497, 96
        %v597 = vpop.permute.xlu0 %596
        %vm598 = vcmask 785408
        %v599 = vsel %vm598, %v593, %v595
        %v600 = vsel %vm598, %v595, %v597
        %v603 = vsel %vm535, %v599, 0.0
        %v604 = vsel %vm536, %v600, 0.0
        %605 = vrot.lane.b32.xlu0 %v496, 94
        %v606 = vpop.permute.xlu0 %605
        %607 = vrot.lane.b32.xlu0 %v492, 94
        %v608 = vpop.permute.xlu0 %607
        %609 = vrot.lane.b32.xlu0 %v497, 94
        %v610 = vpop.permute.xlu0 %609
        %vm611 = vcmask 769024
        %v612 = vsel %vm611, %v606, %v608
        %v613 = vsel %vm611, %v608, %v610
        %v616 = vsel %vm549, %v612, 0.0
        %v617 = vsel %vm550, %v613, 0.0
        %v618 = vrot.slane %v496, 4
        %v619 = vrot.slane %v492, 4
        %v620 = vrot.slane %v497, 4
        %621 = vrot.lane.b32.xlu0 %v618, 127
        %v622 = vpop.permute.xlu0 %621
        %623 = vrot.lane.b32.xlu0 %v619, 127
        %v624 = vpop.permute.xlu0 %623
        %625 = vrot.lane.b32.xlu0 %v620, 127
        %v626 = vpop.permute.xlu0 %625
        %vm627 = vcmask 1039360
        %v628 = vsel %vm627, %v622, %v624
        %v629 = vsel %vm627, %v624, %v626
        %v634 = vrot.slane %v577, 4
        %v635 = vrot.slane %v578, 4
        %638 = vrot.lane.b32.xlu0 %v496, 111
        %v639 = vpop.permute.xlu0 %638
        %640 = vrot.lane.b32.xlu0 %v492, 111
        %v641 = vpop.permute.xlu0 %640
        %642 = vrot.lane.b32.xlu0 %v497, 111
        %v643 = vpop.permute.xlu0 %642
        %vm644 = vcmask 908288
        %v645 = vsel %vm644, %v639, %v641
        %v646 = vsel %vm644, %v641, %v643
        %v651 = vrot.slane %v590, 4
        %v652 = vrot.slane %v591, 4
        %655 = vrot.lane.b32.xlu0 %v618, 95
        %v656 = vpop.permute.xlu0 %655
        %657 = vrot.lane.b32.xlu0 %v619, 95
        %v658 = vpop.permute.xlu0 %657
        %659 = vrot.lane.b32.xlu0 %v620, 95
        %v660 = vpop.permute.xlu0 %659
        %vm661 = vcmask 777216
        %v662 = vsel %vm661, %v656, %v658
        %v663 = vsel %vm661, %v658, %v660
        %vm666 = vcmask 1043456
        %v667 = vsel %vm666, %v537, %v628
        %v668 = vsel %vm666, %v538, %v629
        %v669 = vsel %vm666, %v564, %v634
        %v670 = vsel %vm666, %v565, %v635
        %v671 = vsel %vm666, %v645, %v651
        %v672 = vsel %vm666, %v646, %v652
        %v673 = vsel %vm666, %v603, %v662
        %v674 = vsel %vm666, %v604, %v663
        %v675 = vpack.c.bf16 %v669, %v667
        %v676 = vpack.c.bf16 %v670, %v668
        %v677 = vpack.c.bf16 %v673, %v671
        %v678 = vpack.c.bf16 %v674, %v672
        %v679 = vpack.c.bf16 %v616, %v616
        %v680 = vpack.c.bf16 %v617, %v617
        %682 = vset.pattern.permute.xlu0 0
        %683 = vperm.xlu0 %682, %v484
        %v684 = vpop.permute.xlu0 %683
        %vm686 = vcmask 293888
        %v688 = vsel %vm686, %v483, 0
        %vm690 = vcmask 1041408
        %v692 = vsel %vm690, %v679, 0
        %v695 = vsel %vm690, %v680, 0
        %697 = vmatprep.subr.bf16.mxu0 0
        %698 = vmatpush1.bf16.msra.mxu0 0
        %699 = vmatprep.subr.bf16.mxu0 0
        %700 = vmatpush1.bf16.msra.mxu0 0
        %701 = vmatprep.subr.bf16.mxu0 0
        %702 = vmatpush1.bf16.msra.mxu0 0
        %703 = vmatprep.subr.bf16.mxu0 0
        %704 = vmatpush1.bf16.msra.mxu0 0
        %705 = vmatprep.subr.bf16.mxu0 0
        %706 = vmatpush1.bf16.msra.mxu0 0
        %707 = vmatprep.subr.bf16.mxu0 %v695
        %708 = vmatpush1.bf16.msra.mxu0 %v692
        %709 = vmatprep.subr.bf16.mxu0 %v678
        %710 = vmatpush1.bf16.msra.mxu0 %v677
        %711 = vmatprep.subr.bf16.mxu0 %v676
        %712 = vmatpush1.bf16.msra.mxu0 %v675
        %713 = vmatprep.subr.bf16.mxu0 0
        %714 = vmatpush2.bf16.msra.mxu0 0
        %715 = vmatprep.subr.bf16.mxu0 0
        %716 = vmatpush2.bf16.msra.mxu0 0
        %717 = vmatprep.subr.bf16.mxu0 0
        %718 = vmatpush2.bf16.msra.mxu0 0
        %719 = vmatprep.subr.bf16.mxu0 0
        %720 = vmatpush2.bf16.msra.mxu0 0
        %721 = vmatprep.subr.bf16.mxu0 0
        %722 = vmatpush2.bf16.msra.mxu0 0
        %723 = vmatprep.subr.bf16.mxu0 0
        %724 = vmatpush2.bf16.msra.mxu0 0
        %725 = vmatprep.subr.bf16.mxu0 0
        %726 = vmatpush2.bf16.msra.mxu0 0
        %727 = vmatprep.subr.bf16.mxu0 0
        %728 = vmatpush2.bf16.msra.mxu0 0
        %729 = vmatprep.mubr.bf16.mxu0 0
        %730 = vmatmul.mubr.bf16.gmra.mxu0 %v688
        %v731 = vpop.f32.mrf.mxu0
        %v732 = vadd.f32 %v684, %v731
        %v733 = vpop.f32.mrf.mxu0
        %v734 = vadd.f32 %v684, %v733
        %v735 = vpop.f32.mrf.mxu0
        %v736 = vpop.f32.mrf.mxu0
        %737 = vdwg.mxu0
        %vm738 = vcmp.ge.f32.partialorder %v732, 0.0
        %vm739 = vcmp.ge.f32.partialorder %v734, 0.0
        %v740 = vmul.f32 %v732, 0.01
        %v741 = vmul.f32 %v734, 0.01
        %v742 = vsel %vm738, %v732, %v740
        %v743 = vsel %vm739, %v734, %v741
        %v744 = vld [vmem:[%s4] sm:$0xf]
        %v745 = vld [vmem:[%s5] sm:$0xff]
        %748 = vrot.lane.b32.xlu0 %v742, 17
        %v749 = vpop.permute.xlu0 %748
        %750 = vrot.lane.b32.xlu0 %v743, 17
        %v751 = vpop.permute.xlu0 %750
        %v752 = vsel %vm491, %v749, %v751
        %v756 = vsel %vm491, 0.0, %v749
        %v757 = vsel %vm491, %v751, 0.0
        %v758 = vsel %vm535, %v756, 0.0
        %v759 = vsel %vm536, %v752, 0.0
        %762 = vrot.lane.b32.xlu0 %v756, 126
        %v763 = vpop.permute.xlu0 %762
        %764 = vrot.lane.b32.xlu0 %v752, 126
        %v765 = vpop.permute.xlu0 %764
        %766 = vrot.lane.b32.xlu0 %v757, 126
        %v767 = vpop.permute.xlu0 %766
        %v768 = vsel %vm559, %v763, %v765
        %v769 = vsel %vm559, %v765, %v767
        %v772 = vsel %vm549, %v768, 0.0
        %v773 = vsel %vm550, %v769, 0.0
        %774 = vrot.lane.b32.xlu0 %v756, 112
        %v775 = vpop.permute.xlu0 %774
        %776 = vrot.lane.b32.xlu0 %v752, 112
        %v777 = vpop.permute.xlu0 %776
        %778 = vrot.lane.b32.xlu0 %v757, 112
        %v779 = vpop.permute.xlu0 %778
        %v780 = vsel %vm572, %v775, %v777
        %v781 = vsel %vm572, %v777, %v779
        %v784 = vsel %vm535, %v780, 0.0
        %v785 = vsel %vm536, %v781, 0.0
        %786 = vrot.lane.b32.xlu0 %v756, 110
        %v787 = vpop.permute.xlu0 %786
        %788 = vrot.lane.b32.xlu0 %v752, 110
        %v789 = vpop.permute.xlu0 %788
        %790 = vrot.lane.b32.xlu0 %v757, 110
        %v791 = vpop.permute.xlu0 %790
        %v792 = vsel %vm585, %v787, %v789
        %v793 = vsel %vm585, %v789, %v791
        %v796 = vsel %vm549, %v792, 0.0
        %v797 = vsel %vm550, %v793, 0.0
        %798 = vrot.lane.b32.xlu0 %v756, 96
        %v799 = vpop.permute.xlu0 %798
        %800 = vrot.lane.b32.xlu0 %v752, 96
        %v801 = vpop.permute.xlu0 %800
        %802 = vrot.lane.b32.xlu0 %v757, 96
        %v803 = vpop.permute.xlu0 %802
        %v804 = vsel %vm598, %v799, %v801
        %v805 = vsel %vm598, %v801, %v803
        %v808 = vsel %vm535, %v804, 0.0
        %v809 = vsel %vm536, %v805, 0.0
        %810 = vrot.lane.b32.xlu0 %v756, 94
        %v811 = vpop.permute.xlu0 %810
        %812 = vrot.lane.b32.xlu0 %v752, 94
        %v813 = vpop.permute.xlu0 %812
        %814 = vrot.lane.b32.xlu0 %v757, 94
        %v815 = vpop.permute.xlu0 %814
        %v816 = vsel %vm611, %v811, %v813
        %v817 = vsel %vm611, %v813, %v815
        %v820 = vsel %vm549, %v816, 0.0
        %v821 = vsel %vm550, %v817, 0.0
        %822 = vrot.lane.b32.xlu0 %v756, 127
        %v823 = vpop.permute.xlu0 %822
        %824 = vrot.lane.b32.xlu0 %v752, 127
        %v825 = vpop.permute.xlu0 %824
        %826 = vrot.lane.b32.xlu0 %v757, 127
        %v827 = vpop.permute.xlu0 %826
        %v828 = vsel %vm627, %v823, %v825
        %v829 = vsel %vm627, %v825, %v827
        %832 = vrot.lane.b32.xlu0 %v756, 111
        %v833 = vpop.permute.xlu0 %832
        %834 = vrot.lane.b32.xlu0 %v752, 111
        %v835 = vpop.permute.xlu0 %834
        %836 = vrot.lane.b32.xlu0 %v757, 111
        %v837 = vpop.permute.xlu0 %836
        %v838 = vsel %vm644, %v833, %v835
        %v839 = vsel %vm644, %v835, %v837
        %842 = vrot.lane.b32.xlu0 %v756, 95
        %v843 = vpop.permute.xlu0 %842
        %844 = vrot.lane.b32.xlu0 %v752, 95
        %v845 = vpop.permute.xlu0 %844
        %846 = vrot.lane.b32.xlu0 %v757, 95
        %v847 = vpop.permute.xlu0 %846
        %v848 = vsel %vm661, %v843, %v845
        %v849 = vsel %vm661, %v845, %v847
        %v852 = vpack.c.bf16 %v828, %v758
        %v853 = vpack.c.bf16 %v829, %v759
        %v854 = vpack.c.bf16 %v784, %v772
        %v855 = vpack.c.bf16 %v785, %v773
        %v856 = vpack.c.bf16 %v796, %v838
        %v857 = vpack.c.bf16 %v797, %v839
        %v858 = vpack.c.bf16 %v848, %v808
        %v859 = vpack.c.bf16 %v849, %v809
        %v860 = vpack.c.bf16 %v820, %v820
        %v861 = vpack.c.bf16 %v821, %v821
        %863 = vset.pattern.permute.xlu0 0
        %864 = vperm.xlu0 %863, %v745
        %v865 = vpop.permute.xlu0 %864
        %vm867 = vcmask 588800
        %v869 = vsel %vm867, %v744, 0
        %v872 = vsel %vm666, %v860, 0
        %v875 = vsel %vm666, %v861, 0
        %877 = vmatprep.subr.bf16.mxu0 0
        %878 = vmatpush1.bf16.msra.mxu0 0
        %879 = vmatprep.subr.bf16.mxu0 0
        %880 = vmatpush1.bf16.msra.mxu0 0
        %881 = vmatprep.subr.bf16.mxu0 0
        %882 = vmatpush1.bf16.msra.mxu0 0
        %883 = vmatprep.subr.bf16.mxu0 %v875
        %884 = vmatpush1.bf16.msra.mxu0 %v872
        %885 = vmatprep.subr.bf16.mxu0 %v859
        %886 = vmatpush1.bf16.msra.mxu0 %v858
        %887 = vmatprep.subr.bf16.mxu0 %v857
        %888 = vmatpush1.bf16.msra.mxu0 %v856
        %889 = vmatprep.subr.bf16.mxu0 %v855
        %890 = vmatpush1.bf16.msra.mxu0 %v854
        %891 = vmatprep.subr.bf16.mxu0 %v853
        %892 = vmatpush1.bf16.msra.mxu0 %v852
        %893 = vmatprep.subr.bf16.mxu0 0
        %894 = vmatpush2.bf16.msra.mxu0 0
        %895 = vmatprep.subr.bf16.mxu0 0
        %896 = vmatpush2.bf16.msra.mxu0 0
        %897 = vmatprep.subr.bf16.mxu0 0
        %898 = vmatpush2.bf16.msra.mxu0 0
        %899 = vmatprep.subr.bf16.mxu0 0
        %900 = vmatpush2.bf16.msra.mxu0 0
        %901 = vmatprep.subr.bf16.mxu0 0
        %902 = vmatpush2.bf16.msra.mxu0 0
        %903 = vmatprep.subr.bf16.mxu0 0
        %904 = vmatpush2.bf16.msra.mxu0 0
        %905 = vmatprep.subr.bf16.mxu0 0
        %906 = vmatpush2.bf16.msra.mxu0 0
        %907 = vmatprep.subr.bf16.mxu0 0
        %908 = vmatpush2.bf16.msra.mxu0 0
        %909 = vmatprep.mubr.bf16.mxu0 0
        %910 = vmatmul.mubr.bf16.gmra.mxu0 %v869
        %v911 = vpop.f32.mrf.mxu0
        %v912 = vadd.f32 %v865, %v911
        %v913 = vpop.f32.mrf.mxu0
        %v914 = vadd.f32 %v865, %v913
        %v915 = vpop.f32.mrf.mxu0
        %v916 = vpop.f32.mrf.mxu0
        %917 = vdwg.mxu0
        %vm918 = vcmp.ge.f32.partialorder %v912, 0.0
        %vm919 = vcmp.ge.f32.partialorder %v914, 0.0
        %v920 = vmul.f32 %v912, 0.01
        %v921 = vmul.f32 %v914, 0.01
        %v922 = vsel %vm918, %v912, %v920
        %v923 = vsel %vm919, %v914, %v921
        %v924 = vld [vmem:[%s8] sm:$0xf]
        %927 = vrot.lane.b32.xlu0 %v922, 17
        %v928 = vpop.permute.xlu0 %927
        %929 = vrot.lane.b32.xlu0 %v923, 17
        %v930 = vpop.permute.xlu0 %929
        %v931 = vsel %vm491, %v928, %v930
        %v935 = vsel %vm491, 0.0, %v928
        %v936 = vsel %vm491, %v930, 0.0
        %v937 = vsel %vm535, %v935, 0.0
        %v938 = vsel %vm536, %v931, 0.0
        %941 = vrot.lane.b32.xlu0 %v935, 126
        %v942 = vpop.permute.xlu0 %941
        %943 = vrot.lane.b32.xlu0 %v931, 126
        %v944 = vpop.permute.xlu0 %943
        %945 = vrot.lane.b32.xlu0 %v936, 126
        %v946 = vpop.permute.xlu0 %945
        %v947 = vsel %vm559, %v942, %v944
        %v948 = vsel %vm559, %v944, %v946
        %v951 = vsel %vm549, %v947, 0.0
        %v952 = vsel %vm550, %v948, 0.0
        %953 = vrot.lane.b32.xlu0 %v935, 112
        %v954 = vpop.permute.xlu0 %953
        %955 = vrot.lane.b32.xlu0 %v931, 112
        %v956 = vpop.permute.xlu0 %955
        %957 = vrot.lane.b32.xlu0 %v936, 112
        %v958 = vpop.permute.xlu0 %957
        %v959 = vsel %vm572, %v954, %v956
        %v960 = vsel %vm572, %v956, %v958
        %v963 = vsel %vm535, %v959, 0.0
        %v964 = vsel %vm536, %v960, 0.0
        %965 = vrot.lane.b32.xlu0 %v935, 110
        %v966 = vpop.permute.xlu0 %965
        %967 = vrot.lane.b32.xlu0 %v931, 110
        %v968 = vpop.permute.xlu0 %967
        %969 = vrot.lane.b32.xlu0 %v936, 110
        %v970 = vpop.permute.xlu0 %969
        %v971 = vsel %vm585, %v966, %v968
        %v972 = vsel %vm585, %v968, %v970
        %v975 = vsel %vm549, %v971, 0.0
        %v976 = vsel %vm550, %v972, 0.0
        %977 = vrot.lane.b32.xlu0 %v935, 96
        %v978 = vpop.permute.xlu0 %977
        %979 = vrot.lane.b32.xlu0 %v931, 96
        %v980 = vpop.permute.xlu0 %979
        %981 = vrot.lane.b32.xlu0 %v936, 96
        %v982 = vpop.permute.xlu0 %981
        %v983 = vsel %vm598, %v978, %v980
        %v984 = vsel %vm598, %v980, %v982
        %v987 = vsel %vm535, %v983, 0.0
        %v988 = vsel %vm536, %v984, 0.0
        %989 = vrot.lane.b32.xlu0 %v935, 94
        %v990 = vpop.permute.xlu0 %989
        %991 = vrot.lane.b32.xlu0 %v931, 94
        %v992 = vpop.permute.xlu0 %991
        %993 = vrot.lane.b32.xlu0 %v936, 94
        %v994 = vpop.permute.xlu0 %993
        %v995 = vsel %vm611, %v990, %v992
        %v996 = vsel %vm611, %v992, %v994
        %v999 = vsel %vm549, %v995, 0.0
        %v1000 = vsel %vm550, %v996, 0.0
        %1001 = vrot.lane.b32.xlu0 %v935, 127
        %v1002 = vpop.permute.xlu0 %1001
        %1003 = vrot.lane.b32.xlu0 %v931, 127
        %v1004 = vpop.permute.xlu0 %1003
        %1005 = vrot.lane.b32.xlu0 %v936, 127
        %v1006 = vpop.permute.xlu0 %1005
        %v1007 = vsel %vm627, %v1002, %v1004
        %v1008 = vsel %vm627, %v1004, %v1006
        %1011 = vrot.lane.b32.xlu0 %v935, 111
        %v1012 = vpop.permute.xlu0 %1011
        %1013 = vrot.lane.b32.xlu0 %v931, 111
        %v1014 = vpop.permute.xlu0 %1013
        %1015 = vrot.lane.b32.xlu0 %v936, 111
        %v1016 = vpop.permute.xlu0 %1015
        %v1017 = vsel %vm644, %v1012, %v1014
        %v1018 = vsel %vm644, %v1014, %v1016
        %1021 = vrot.lane.b32.xlu0 %v935, 95
        %v1022 = vpop.permute.xlu0 %1021
        %1023 = vrot.lane.b32.xlu0 %v931, 95
        %v1024 = vpop.permute.xlu0 %1023
        %1025 = vrot.lane.b32.xlu0 %v936, 95
        %v1026 = vpop.permute.xlu0 %1025
        %v1027 = vsel %vm661, %v1022, %v1024
        %v1028 = vsel %vm661, %v1024, %v1026
        %v1031 = vpack.c.bf16 %v1007, %v937
        %v1032 = vpack.c.bf16 %v1008, %v938
        %v1033 = vpack.c.bf16 %v963, %v951
        %v1034 = vpack.c.bf16 %v964, %v952
        %v1035 = vpack.c.bf16 %v975, %v1017
        %v1036 = vpack.c.bf16 %v976, %v1018
        %v1037 = vpack.c.bf16 %v1027, %v987
        %v1038 = vpack.c.bf16 %v1028, %v988
        %v1039 = vpack.c.bf16 %v999, %v999
        %v1040 = vpack.c.bf16 %v1000, %v1000
        %v1041 = vld [vmem:[%s7] sm:$0xf]
        %v1042 = vld [vmem:[%s389] sm:$0xff]
        %v1044 = vcombine.high %v1042, %v1042
        %1045 = vrot.lane.b32.xlu0 %v1042, 17
        %v1046 = vpop.permute.xlu0 %1045
        %1047 = vrot.lane.b32.xlu0 %v1044, 17
        %v1048 = vpop.permute.xlu0 %1047
        %v1049 = vsel %vm491, %v1046, %v1048
        %v1053 = vsel %vm491, 0.0, %v1046
        %v1054 = vsel %vm491, %v1048, 0.0
        %v1055 = vsel %vm535, %v1053, 0.0
        %v1056 = vsel %vm536, %v1049, 0.0
        %1059 = vrot.lane.b32.xlu0 %v1053, 126
        %v1060 = vpop.permute.xlu0 %1059
        %1061 = vrot.lane.b32.xlu0 %v1049, 126
        %v1062 = vpop.permute.xlu0 %1061
        %1063 = vrot.lane.b32.xlu0 %v1054, 126
        %v1064 = vpop.permute.xlu0 %1063
        %v1065 = vsel %vm559, %v1060, %v1062
        %v1066 = vsel %vm559, %v1062, %v1064
        %v1069 = vsel %vm549, %v1065, 0.0
        %v1070 = vsel %vm550, %v1066, 0.0
        %1071 = vrot.lane.b32.xlu0 %v1053, 112
        %v1072 = vpop.permute.xlu0 %1071
        %1073 = vrot.lane.b32.xlu0 %v1049, 112
        %v1074 = vpop.permute.xlu0 %1073
        %1075 = vrot.lane.b32.xlu0 %v1054, 112
        %v1076 = vpop.permute.xlu0 %1075
        %v1077 = vsel %vm572, %v1072, %v1074
        %v1078 = vsel %vm572, %v1074, %v1076
        %v1081 = vsel %vm535, %v1077, 0.0
        %v1082 = vsel %vm536, %v1078, 0.0
        %1083 = vrot.lane.b32.xlu0 %v1053, 110
        %v1084 = vpop.permute.xlu0 %1083
        %1085 = vrot.lane.b32.xlu0 %v1049, 110
        %v1086 = vpop.permute.xlu0 %1085
        %1087 = vrot.lane.b32.xlu0 %v1054, 110
        %v1088 = vpop.permute.xlu0 %1087
        %v1089 = vsel %vm585, %v1084, %v1086
        %v1090 = vsel %vm585, %v1086, %v1088
        %v1093 = vsel %vm549, %v1089, 0.0
        %v1094 = vsel %vm550, %v1090, 0.0
        %1095 = vrot.lane.b32.xlu0 %v1053, 96
        %v1096 = vpop.permute.xlu0 %1095
        %1097 = vrot.lane.b32.xlu0 %v1049, 96
        %v1098 = vpop.permute.xlu0 %1097
        %1099 = vrot.lane.b32.xlu0 %v1054, 96
        %v1100 = vpop.permute.xlu0 %1099
        %v1101 = vsel %vm598, %v1096, %v1098
        %v1102 = vsel %vm598, %v1098, %v1100
        %v1105 = vsel %vm535, %v1101, 0.0
        %v1106 = vsel %vm536, %v1102, 0.0
        %1107 = vrot.lane.b32.xlu0 %v1053, 94
        %v1108 = vpop.permute.xlu0 %1107
        %1109 = vrot.lane.b32.xlu0 %v1049, 94
        %v1110 = vpop.permute.xlu0 %1109
        %1111 = vrot.lane.b32.xlu0 %v1054, 94
        %v1112 = vpop.permute.xlu0 %1111
        %v1113 = vsel %vm611, %v1108, %v1110
        %v1114 = vsel %vm611, %v1110, %v1112
        %v1117 = vsel %vm549, %v1113, 0.0
        %v1118 = vsel %vm550, %v1114, 0.0
        %v1119 = vrot.slane %v1053, 4
        %v1120 = vrot.slane %v1049, 4
        %v1121 = vrot.slane %v1054, 4
        %1122 = vrot.lane.b32.xlu0 %v1119, 127
        %v1123 = vpop.permute.xlu0 %1122
        %1124 = vrot.lane.b32.xlu0 %v1120, 127
        %v1125 = vpop.permute.xlu0 %1124
        %1126 = vrot.lane.b32.xlu0 %v1121, 127
        %v1127 = vpop.permute.xlu0 %1126
        %v1128 = vsel %vm627, %v1123, %v1125
        %v1129 = vsel %vm627, %v1125, %v1127
        %v1134 = vrot.slane %v1081, 4
        %v1135 = vrot.slane %v1082, 4
        %1138 = vrot.lane.b32.xlu0 %v1053, 111
        %v1139 = vpop.permute.xlu0 %1138
        %1140 = vrot.lane.b32.xlu0 %v1049, 111
        %v1141 = vpop.permute.xlu0 %1140
        %1142 = vrot.lane.b32.xlu0 %v1054, 111
        %v1143 = vpop.permute.xlu0 %1142
        %v1144 = vsel %vm644, %v1139, %v1141
        %v1145 = vsel %vm644, %v1141, %v1143
        %v1150 = vrot.slane %v1093, 4
        %v1151 = vrot.slane %v1094, 4
        %1154 = vrot.lane.b32.xlu0 %v1119, 95
        %v1155 = vpop.permute.xlu0 %1154
        %1156 = vrot.lane.b32.xlu0 %v1120, 95
        %v1157 = vpop.permute.xlu0 %1156
        %1158 = vrot.lane.b32.xlu0 %v1121, 95
        %v1159 = vpop.permute.xlu0 %1158
        %v1160 = vsel %vm661, %v1155, %v1157
        %v1161 = vsel %vm661, %v1157, %v1159
        %v1164 = vsel %vm666, %v1055, %v1128
        %v1165 = vsel %vm666, %v1056, %v1129
        %v1166 = vsel %vm666, %v1069, %v1134
        %v1167 = vsel %vm666, %v1070, %v1135
        %v1168 = vsel %vm666, %v1144, %v1150
        %v1169 = vsel %vm666, %v1145, %v1151
        %v1170 = vsel %vm666, %v1105, %v1160
        %v1171 = vsel %vm666, %v1106, %v1161
        %v1172 = vpack.c.bf16 %v1166, %v1164
        %v1173 = vpack.c.bf16 %v1167, %v1165
        %v1174 = vpack.c.bf16 %v1170, %v1168
        %v1175 = vpack.c.bf16 %v1171, %v1169
        %v1176 = vpack.c.bf16 %v1117, %v1117
        %v1177 = vpack.c.bf16 %v1118, %v1118
        %v1179 = vsel %vm686, %v1041, 0
        %v1182 = vsel %vm690, %v1176, 0
        %v1185 = vsel %vm690, %v1177, 0
        %1187 = vmatprep.subr.bf16.mxu0 0
        %1188 = vmatpush1.bf16.msra.mxu0 0
        %1189 = vmatprep.subr.bf16.mxu0 0
        %1190 = vmatpush1.bf16.msra.mxu0 0
        %1191 = vmatprep.subr.bf16.mxu0 0
        %1192 = vmatpush1.bf16.msra.mxu0 0
        %1193 = vmatprep.subr.bf16.mxu0 0
        %1194 = vmatpush1.bf16.msra.mxu0 0
        %1195 = vmatprep.subr.bf16.mxu0 0
        %1196 = vmatpush1.bf16.msra.mxu0 0
        %1197 = vmatprep.subr.bf16.mxu0 %v1185
        %1198 = vmatpush1.bf16.msra.mxu0 %v1182
        %1199 = vmatprep.subr.bf16.mxu0 %v1175
        %1200 = vmatpush1.bf16.msra.mxu0 %v1174
        %1201 = vmatprep.subr.bf16.mxu0 %v1173
        %1202 = vmatpush1.bf16.msra.mxu0 %v1172
        %1203 = vmatprep.subr.bf16.mxu0 0
        %1204 = vmatpush2.bf16.msra.mxu0 0
        %1205 = vmatprep.subr.bf16.mxu0 0
        %1206 = vmatpush2.bf16.msra.mxu0 0
        %1207 = vmatprep.subr.bf16.mxu0 0
        %1208 = vmatpush2.bf16.msra.mxu0 0
        %1209 = vmatprep.subr.bf16.mxu0 0
        %1210 = vmatpush2.bf16.msra.mxu0 0
        %1211 = vmatprep.subr.bf16.mxu0 0
        %1212 = vmatpush2.bf16.msra.mxu0 0
        %1213 = vmatprep.subr.bf16.mxu0 0
        %1214 = vmatpush2.bf16.msra.mxu0 0
        %1215 = vmatprep.subr.bf16.mxu0 0
        %1216 = vmatpush2.bf16.msra.mxu0 0
        %1217 = vmatprep.subr.bf16.mxu0 0
        %1218 = vmatpush2.bf16.msra.mxu0 0
        %1219 = vmatprep.mubr.bf16.mxu0 0
        %1220 = vmatmul.mubr.bf16.gmra.mxu0 %v1179
        %v1221 = vpop.f32.mrf.mxu0
        %v1222 = vadd.f32 0.0, %v1221
        %v1223 = vpop.f32.mrf.mxu0
        %v1224 = vadd.f32 0.0, %v1223
        %v1225 = vpop.f32.mrf.mxu0
        %v1226 = vpop.f32.mrf.mxu0
        %1227 = vdwg.mxu0
        %v1229 = vsel %vm867, %v924, 0
        %v1232 = vsel %vm666, %v1039, 0
        %v1235 = vsel %vm666, %v1040, 0
        %1237 = vmatprep.subr.bf16.mxu0 0
        %1238 = vmatpush1.bf16.msra.mxu0 0
        %1239 = vmatprep.subr.bf16.mxu0 0
        %1240 = vmatpush1.bf16.msra.mxu0 0
        %1241 = vmatprep.subr.bf16.mxu0 0
        %1242 = vmatpush1.bf16.msra.mxu0 0
        %1243 = vmatprep.subr.bf16.mxu0 %v1235
        %1244 = vmatpush1.bf16.msra.mxu0 %v1232
        %1245 = vmatprep.subr.bf16.mxu0 %v1038
        %1246 = vmatpush1.bf16.msra.mxu0 %v1037
        %1247 = vmatprep.subr.bf16.mxu0 %v1036
        %1248 = vmatpush1.bf16.msra.mxu0 %v1035
        %1249 = vmatprep.subr.bf16.mxu0 %v1034
        %1250 = vmatpush1.bf16.msra.mxu0 %v1033
        %1251 = vmatprep.subr.bf16.mxu0 %v1032
        %1252 = vmatpush1.bf16.msra.mxu0 %v1031
        %1253 = vmatprep.subr.bf16.mxu0 0
        %1254 = vmatpush2.bf16.msra.mxu0 0
        %1255 = vmatprep.subr.bf16.mxu0 0
        %1256 = vmatpush2.bf16.msra.mxu0 0
        %1257 = vmatprep.subr.bf16.mxu0 0
        %1258 = vmatpush2.bf16.msra.mxu0 0
        %1259 = vmatprep.subr.bf16.mxu0 0
        %1260 = vmatpush2.bf16.msra.mxu0 0
        %1261 = vmatprep.subr.bf16.mxu0 0
        %1262 = vmatpush2.bf16.msra.mxu0 0
        %1263 = vmatprep.subr.bf16.mxu0 0
        %1264 = vmatpush2.bf16.msra.mxu0 0
        %1265 = vmatprep.subr.bf16.mxu0 0
        %1266 = vmatpush2.bf16.msra.mxu0 0
        %1267 = vmatprep.subr.bf16.mxu0 0
        %1268 = vmatpush2.bf16.msra.mxu0 0
        %1269 = vmatprep.mubr.bf16.mxu0 0
        %1270 = vmatmul.mubr.bf16.gmra.mxu0 %v1229
        %v1271 = vpop.f32.mrf.mxu0
        %v1272 = vadd.f32 %v1222, %v1271
        %v1273 = vpop.f32.mrf.mxu0
        %v1274 = vadd.f32 %v1224, %v1273
        %v1275 = vpop.f32.mrf.mxu0
        %v1276 = vpop.f32.mrf.mxu0
        %1277 = vdwg.mxu0
        %v1278 = vld [vmem:[%s9] sm:$0xff]
        %1280 = vset.pattern.permute.xlu0 0
        %1281 = vperm.xlu0 %1280, %v1278
        %v1282 = vpop.permute.xlu0 %1281
        %v1284 = vadd.f32 %v1272, %v1282
        %v1285 = vadd.f32 %v1274, %v1282
        %vm1286 = vcmp.ge.f32.partialorder %v1284, 0.0
        %vm1287 = vcmp.ge.f32.partialorder %v1285, 0.0
        %v1288 = vmul.f32 %v1284, 0.01
        %v1289 = vmul.f32 %v1285, 0.01
        %v1290 = vsel %vm1286, %v1284, %v1288
        %v1291 = vsel %vm1287, %v1285, %v1289
        %1292 = vst [vmem:[%s380] sm:$0xff] %v1290
        %1293 = vst [vmem:[%s380 + $0x8] sm:$0xff] %v1291
        %s1294 = sand.u32 %s253, 1
        %s1295 = scalar_lea.sflag [#allocation4], %s1294
        %s1296 = sand.u32 %s253, 1
        %s1297 = smul.addr %s1296, 16
        %s1298 = scalar_lea.vmem [#allocation5], %s1297
        // Predicated region
        $region65: #{tpu_custom_call.1} parent=59 // pred_check
          %p1299 = pneg %p263
        $region66: #{tpu_custom_call.1} parent=59 // pred_check_branch
          %1301 = sbr.rel (%p1299) target = $region68
        $region67: #{tpu_custom_call.1} parent=59 // pred_region
          %s1303 = ssub.s32 256, 256
          %1304 = vsyncadd %s1295, %s1303
          %s1305 = smul.addr %s25, 2
          %s1306 = smul.addr %s1305, 128
          %s1307 = scalar_lea.hbm %s10, %s1306
          %s1309 = sshll.u32 %s1298, 4
          %s1310 = int_to_ptr.vmem [resolvable:$true] %s1309
          %1312 = dma.vmem_to_hbm [thread:$0]  %s1310, 256, %s1307, %s1295
        $region68: #{tpu_custom_call.1} parent=59 // pred_fallthru
          _
      $region60: #{tpu_custom_call.1} parent=5 // pred_fallthru
        _
      %p1313 = scmp.le.s32.totalorder 2, %s20
      // Predicated region
      $region69: #{tpu_custom_call.1} parent=5 // pred_check
        %p1314 = pneg %p1313
      $region70: #{tpu_custom_call.1} parent=5 // pred_check_branch
        %1316 = sbr.rel (%p1314) target = $region72
      $region71: #{tpu_custom_call.1} parent=5 // pred_region
        %s1317 = ssub.s32 %s20, 2
        // Predicated region
        $region73: #{tpu_custom_call.1} parent=71 // pred_check
          %p1318 = pneg %p269
        $region74: #{tpu_custom_call.1} parent=71 // pred_check_branch
          %1320 = sbr.rel (%p1318) target = $region76
        $region75: #{tpu_custom_call.1} parent=71 // pred_region
          %s1321 = sand.u32 %s254, 1
          %s1322 = scalar_lea.sflag [#allocation4], %s1321
          %s1323 = sand.u32 %s254, 1
          %s1324 = smul.addr %s1323, 16
          %s1325 = scalar_lea.vmem [#allocation5], %s1324
          %1326 = dma.done %s1322, 256
        $region76: #{tpu_custom_call.1} parent=71 // pred_fallthru
          _
      $region72: #{tpu_custom_call.1} parent=5 // pred_fallthru
        _
    $region6: #{tpu_custom_call.1} parent=1 // loop_footer
      %s24 = sadd.s32 1, %s20
    $region7: #{tpu_custom_call.1} parent=1 // loop_footer_branch
      %19 = sbr.rel target = $region3
    $region8: #{tpu_custom_call.1} parent=1 // loop_exit
      _
    %1327 = vsyncpa [#allocation3], 1
    %s1328 = scalar_lea.sflag [#allocation3], 1
    %1329 = vsyncpa %s1328, 1
    %1330 = vsyncpa [#allocation4], 1
    %s1331 = scalar_lea.sflag [#allocation4], 1
    %1332 = vsyncpa %s1331, 1

</llo_original>
